<compile_context>
chip_gen: v5e
topology: v5e:2x2
jax: 0.10.0
libtpu: 0.0.40
codegen_flags: <defaults>
</compile_context>

<pallas_src>
import jax
import jax.numpy as jnp
from jax import lax
from jax.experimental import pallas as pl
from jax.experimental.pallas import tpu as pltpu

HID = 32          # hidden_size
VOC = 64          # output_size == voc.num_words (synthetic)
SEQ = 8           # encoder sequence length
BATCH = 2
NLAYERS = 1

HPAD = 128        # lane-padded hidden (each GRU gate gets its own 128-lane block)
VPAD = 128        # lane-padded vocab (lane-dense output stores)
BPAD = 8          # sublane-padded batch


def decoder_kernel(tok_ref, h0_ref, emb_ref, enc_ref, enct_ref,
                   wih_ref, whh_ref, wcat_ref, wout_ref, bias_ref,
                   probs_ref, hid_ref):
    """One decode step; grid axis 0 iterates over (teacher-forced) steps."""
    G = HPAD
    t = pl.program_id(0)

    # Hidden state lives in the resident hidden-output block across grid steps.
    @pl.when(t == 0)
    def _():
        hid_ref[...] = h0_ref[...]

    h = hid_ref[...]                # (BPAD, HPAD) previous hidden
    b = bias_ref[...]               # (4, 3*HPAD): b_ih | b_hh | b_concat | b_out

    # ---- embedding gather: one-hot MXU dot, token ids from SMEM ----
    iota_v = lax.broadcasted_iota(jnp.int32, (1, VPAD), 1)
    onehot = jnp.concatenate(
        [(iota_v == tok_ref[t, i]).astype(jnp.float32) for i in range(BPAD)],
        axis=0)                                                    # (BPAD, VPAD)
    x = jnp.dot(onehot, emb_ref[...], preferred_element_type=jnp.float32)  # (BPAD, HPAD)

    # ---- GRU step: two packed matmuls, gate order (r, z, n), 128-lane gates ----
    gx = jnp.dot(x, wih_ref[...], preferred_element_type=jnp.float32) + b[0:1, :]
    gh = jnp.dot(h, whh_ref[...], preferred_element_type=jnp.float32) + b[1:2, :]
    r = 1.0 / (1.0 + jnp.exp(-(gx[:, 0:G] + gh[:, 0:G])))
    z = 1.0 / (1.0 + jnp.exp(-(gx[:, G:2 * G] + gh[:, G:2 * G])))
    n = jnp.tanh(gx[:, 2 * G:3 * G] + r * gh[:, 2 * G:3 * G])
    h_new = (1.0 - z) * n + z * h                                   # (BPAD, HPAD)

    # ---- dot attention: batched MXU dots, pre-transposed enc (no XLU transpose) ----
    q = h_new[:, None, :]                                           # (B, 1, H)
    scores = jnp.einsum('bqh,bhl->bql', q, enct_ref[...],
                        preferred_element_type=jnp.float32)          # (B, 1, L)
    scores = scores - jnp.max(scores, axis=2, keepdims=True)
    es = jnp.exp(scores)
    attn = es * pl.reciprocal(jnp.sum(es, axis=2, keepdims=True), approx=True)
    context = jnp.einsum('bql,blh->bqh', attn, enc_ref[...],
                         preferred_element_type=jnp.float32)[:, 0, :]  # (B, HPAD)

    # ---- concat Linear (packed (2*HPAD, HPAD) weight) + tanh ----
    wcat = wcat_ref[...]
    concat_out = jnp.tanh(
        jnp.dot(h_new, wcat[0:G, :], preferred_element_type=jnp.float32)
        + jnp.dot(context, wcat[G:2 * G, :], preferred_element_type=jnp.float32)
        + b[2:3, 0:G])

    # ---- output projection + softmax over 128 lane-dense logits ----
    logits = jnp.dot(concat_out, wout_ref[...],
                     preferred_element_type=jnp.float32) + b[3:4, 0:VPAD]
    logits = logits - jnp.max(logits, axis=1, keepdims=True)
    el = jnp.exp(logits)
    probs = el * pl.reciprocal(jnp.sum(el, axis=1, keepdims=True), approx=True)

    probs_ref[...] = probs[None]     # (1, BPAD, VPAD)
    hid_ref[...] = h_new             # carried to next grid step


# ----------------------------------------------------------------------------
# Parameter construction / packing (all transposes & padding done ONCE).
# ----------------------------------------------------------------------------

def init_params(key, hidden, vocab):
    """PyTorch-layout parameters (same layout as nn.GRU / nn.Linear)."""
    ks = jax.random.split(key, 9)
    s = 1.0 / jnp.sqrt(hidden)
    u = lambda k, shape: jax.random.uniform(k, shape, jnp.float32, -s, s)
    return {
        "embedding": u(ks[0], (vocab, hidden)),
        "W_ih": u(ks[1], (3 * hidden, hidden)),   # gru.weight_ih_l0 (r|z|n rows)
        "W_hh": u(ks[2], (3 * hidden, hidden)),   # gru.weight_hh_l0
        "b_ih": u(ks[3], (3 * hidden,)),
        "b_hh": u(ks[4], (3 * hidden,)),
        "W_concat": u(ks[5], (hidden, 2 * hidden)),
        "b_concat": u(ks[6], (hidden,)),
        "W_out": u(ks[7], (vocab, hidden)),
        "b_out": u(ks[8], (vocab,)),
    }


def pack_params(p):
    """One-time pack: transpose, pad each GRU gate to its own 128-lane block."""
    H, V = HID, VOC
    emb = jnp.zeros((VPAD, HPAD), jnp.float32).at[:V, :H].set(p["embedding"])
    wih = jnp.zeros((HPAD, 3 * HPAD), jnp.float32)
    whh = jnp.zeros((HPAD, 3 * HPAD), jnp.float32)
    bias = jnp.zeros((4, 3 * HPAD), jnp.float32)
    for g in range(3):
        wih = wih.at[:H, g * HPAD:g * HPAD + H].set(p["W_ih"][g * H:(g + 1) * H, :].T)
        whh = whh.at[:H, g * HPAD:g * HPAD + H].set(p["W_hh"][g * H:(g + 1) * H, :].T)
        bias = bias.at[0, g * HPAD:g * HPAD + H].set(p["b_ih"][g * H:(g + 1) * H])
        bias = bias.at[1, g * HPAD:g * HPAD + H].set(p["b_hh"][g * H:(g + 1) * H])
    wcat = jnp.zeros((2 * HPAD, HPAD), jnp.float32)
    wcat = wcat.at[:H, :H].set(p["W_concat"][:, :H].T)              # rnn_output part
    wcat = wcat.at[HPAD:HPAD + H, :H].set(p["W_concat"][:, H:].T)   # context part
    wout = jnp.zeros((HPAD, VPAD), jnp.float32).at[:H, :V].set(p["W_out"].T)
    bias = bias.at[2, :H].set(p["b_concat"])
    bias = bias.at[3, V:VPAD].set(-1e9)            # pad lanes -> zero softmax prob
    bias = bias.at[3, :V].set(p["b_out"])
    return {"embedding": emb, "W_ih_t": wih, "W_hh_t": whh,
            "W_cat_t": wcat, "W_out_t": wout, "bias": bias}
    # TODO(synk): at realistic vocab/batch sizes, store these weights as bf16
    #             (keep f32 accumulation) on v6e/v7x; pointless at these shapes.


def prepare_encoder(encoder_outputs):
    """Once per sequence: (L,B,H) -> padded (B,L,H) and pre-transposed (B,H,L)."""
    L, B, H = encoder_outputs.shape
    enc = jnp.transpose(encoder_outputs, (1, 0, 2))                 # (B, L, H)
    enc_blh = jnp.zeros((BPAD, L, HPAD), jnp.float32).at[:B, :, :H].set(enc)
    enc_bhl = jnp.zeros((BPAD, HPAD, L), jnp.float32).at[:B, :H, :].set(
        jnp.transpose(enc, (0, 2, 1)))
    return enc_blh, enc_bhl


# ----------------------------------------------------------------------------
# Kernel launch (single pallas_call over T decode steps).
# ----------------------------------------------------------------------------

def _decode_call(tokens, h0, enc_blh, enc_bhl, pp):
    """tokens: (T, B) int32, h0: (B, HID). Returns probs (T,B,VOC), hidden (B,HID)."""
    T, B = tokens.shape
    L = enc_blh.shape[1]
    tok_p = jnp.zeros((T, BPAD), jnp.int32).at[:, :B].set(tokens)
    h0_p = jnp.zeros((BPAD, HPAD), jnp.float32).at[:B, :HID].set(h0)

    def resident(shape):
        nd = len(shape)
        return pl.BlockSpec(shape, lambda t, tok, _n=nd: (0,) * _n)

    grid_spec = pltpu.PrefetchScalarGridSpec(
        num_scalar_prefetch=1,                     # token ids -> SMEM
        grid=(T,),
        in_specs=[
            resident((BPAD, HPAD)),                # h0
            resident((VPAD, HPAD)),                # embedding table
            resident((BPAD, L, HPAD)),             # enc   (B, L, H)
            resident((BPAD, HPAD, L)),             # enc_t (B, H, L)
            resident((HPAD, 3 * HPAD)),            # W_ih_t
            resident((HPAD, 3 * HPAD)),            # W_hh_t
            resident((2 * HPAD, HPAD)),            # W_cat_t
            resident((HPAD, VPAD)),                # W_out_t
            resident((4, 3 * HPAD)),               # bias slab
        ],
        out_specs=[
            pl.BlockSpec((1, BPAD, VPAD), lambda t, tok: (t, 0, 0)),   # per-step probs
            pl.BlockSpec((BPAD, HPAD), lambda t, tok: (0, 0)),         # resident hidden
        ],
    )
    probs, hid = pl.pallas_call(
        decoder_kernel,
        out_shape=(jax.ShapeDtypeStruct((T, BPAD, VPAD), jnp.float32),
                   jax.ShapeDtypeStruct((BPAD, HPAD), jnp.float32)),
        grid_spec=grid_spec,
        compiler_params=pltpu.CompilerParams(
            dimension_semantics=("arbitrary",)),   # serial recurrence over steps
    )(tok_p, h0_p, pp["embedding"], enc_blh, enc_bhl,
      pp["W_ih_t"], pp["W_hh_t"], pp["W_cat_t"], pp["W_out_t"], pp["bias"])
    return probs[:, :B, :VOC], hid[:B, :HID]


def luong_attn_decoder_step(input_step, last_hidden, encoder_outputs, pp):
    """Module-faithful single forward step (T=1 case of the fused kernel)."""
    enc_blh, enc_bhl = prepare_encoder(encoder_outputs)
    probs, hid = _decode_call(input_step, last_hidden[0], enc_blh, enc_bhl, pp)
    return probs[0], hid[None]                     # (B, VOC), (1, B, HID)


def luong_attn_decoder_decode(tokens, last_hidden, encoder_outputs, pp):
    """Teacher-forced T-step decode fused into ONE pallas_call (amortizes launch,
    keeps weights + encoder outputs VMEM-resident, hidden carried in VMEM)."""
    enc_blh, enc_bhl = prepare_encoder(encoder_outputs)
    probs, hid = _decode_call(tokens, last_hidden[0], enc_blh, enc_bhl, pp)
    return probs, hid[None]                        # (T, B, VOC), (1, B, HID)


# ----------------------------------------------------------------------------
# Pure-JAX reference (PyTorch-layout weights).
# ----------------------------------------------------------------------------

def reference_step(input_step, last_hidden, encoder_outputs, p):
    H = HID
    emb = p["embedding"][input_step[0]]
    h = last_hidden[0]
    gx = emb @ p["W_ih"].T + p["b_ih"]
    gh = h @ p["W_hh"].T + p["b_hh"]
    r = jax.nn.sigmoid(gx[:, 0:H] + gh[:, 0:H])
    z = jax.nn.sigmoid(gx[:, H:2 * H] + gh[:, H:2 * H])
    n = jnp.tanh(gx[:, 2 * H:] + r * gh[:, 2 * H:])
    h_new = (1.0 - z) * n + z * h
    scores = jnp.sum(h_new[None] * encoder_outputs, axis=2).T       # (B, L)
    attn_w = jax.nn.softmax(scores, axis=1)
    context = jnp.einsum('bl,lbh->bh', attn_w, encoder_outputs)
    cat = jnp.concatenate([h_new, context], axis=1)
    co = jnp.tanh(cat @ p["W_concat"].T + p["b_concat"])
    logits = co @ p["W_out"].T + p["b_out"]
    return jax.nn.softmax(logits, axis=1), h_new[None]


def reference_decode(tokens, last_hidden, encoder_outputs, p):
    probs, hid = [], last_hidden
    for t in range(tokens.shape[0]):
        pr, hid = reference_step(tokens[t:t + 1], hid, encoder_outputs, p)
        probs.append(pr)
    return jnp.stack(probs, axis=0), hid


if __name__ == "__main__":
    key = jax.random.PRNGKey(0)
    k_p, k_in, k_h, k_enc, k_tok = jax.random.split(key, 5)

    params = init_params(k_p, HID, VOC)
    packed = pack_params(params)     # pack / transpose / pad once

    input_step = jax.random.randint(k_in, (1, BATCH), 0, VOC, dtype=jnp.int32)
    last_hidden = jax.random.normal(k_h, (NLAYERS, BATCH, HID), jnp.float32)
    encoder_outputs = jax.random.normal(k_enc, (SEQ, BATCH, HID), jnp.float32)

    # --- single-step forward (module semantics) ---
    step = jax.jit(luong_attn_decoder_step)
    out, hidden = step(input_step, last_hidden, encoder_outputs, packed)
    jax.block_until_ready(out)
    jax.block_until_ready(hidden)

    with jax.default_matmul_precision("highest"):
        out_ref, hidden_ref = reference_step(input_step, last_hidden,
                                             encoder_outputs, params)
    assert out.shape == (BATCH, VOC) and hidden.shape == (NLAYERS, BATCH, HID)
    assert jnp.allclose(out, out_ref, atol=2e-3, rtol=2e-3), \
        float(jnp.max(jnp.abs(out - out_ref)))
    assert jnp.allclose(hidden, hidden_ref, atol=2e-3, rtol=2e-3), \
        float(jnp.max(jnp.abs(hidden - hidden_ref)))

    # --- fused multi-step (teacher-forced) decode: one pallas_call for T steps ---
    T = 4
    tokens = jax.random.randint(k_tok, (T, BATCH), 0, VOC, dtype=jnp.int32)
    decode = jax.jit(luong_attn_decoder_decode)
    probs_seq, hidden_seq = decode(tokens, last_hidden, encoder_outputs, packed)
    jax.block_until_ready(probs_seq)
    jax.block_until_ready(hidden_seq)

    with jax.default_matmul_precision("highest"):
        probs_ref_seq, hidden_ref_seq = reference_decode(tokens, last_hidden,
                                                         encoder_outputs, params)
    assert probs_seq.shape == (T, BATCH, VOC)
    assert hidden_seq.shape == (NLAYERS, BATCH, HID)
    assert jnp.allclose(probs_seq, probs_ref_seq, atol=3e-3, rtol=3e-3), \
        float(jnp.max(jnp.abs(probs_seq - probs_ref_seq)))
    assert jnp.allclose(hidden_seq, hidden_ref_seq, atol=3e-3, rtol=3e-3), \
        float(jnp.max(jnp.abs(hidden_seq - hidden_ref_seq)))

    print("KERNEL_OK")
</pallas_src>

<mosaic_0001>
module attributes {stable_mosaic.version = 11 : i64} {
  func.func @decoder_kernel(%arg0: i32, %arg1: memref<1x8xi32, #tpu.memory_space<smem>>, %arg2: memref<8x128xf32, #tpu.memory_space<vmem>>, %arg3: memref<128x128xf32, #tpu.memory_space<vmem>>, %arg4: memref<8x8x128xf32, #tpu.memory_space<vmem>>, %arg5: memref<8x128x8xf32, #tpu.memory_space<vmem>>, %arg6: memref<128x384xf32, #tpu.memory_space<vmem>>, %arg7: memref<128x384xf32, #tpu.memory_space<vmem>>, %arg8: memref<256x128xf32, #tpu.memory_space<vmem>>, %arg9: memref<128x128xf32, #tpu.memory_space<vmem>>, %arg10: memref<4x384xf32, #tpu.memory_space<vmem>>, %arg11: memref<1x8x128xf32, #tpu.memory_space<vmem>>, %arg12: memref<8x128xf32, #tpu.memory_space<vmem>>) attributes {dimension_semantics = [#tpu.dimension_semantics<arbitrary>], iteration_bounds = array<i64: 1>, scalar_prefetch = 1 : i64, scratch_operands = 0 : i64, tpu.core_type = #tpu.core_type<tc>, window_params = [{pipeline_mode = #tpu.pipeline_mode<synchronous>, transform_indices = @transform_0, window_bounds = array<i64: 8, 128>}, {pipeline_mode = #tpu.pipeline_mode<synchronous>, transform_indices = @transform_1, window_bounds = array<i64: 128, 128>}, {pipeline_mode = #tpu.pipeline_mode<synchronous>, transform_indices = @transform_2, window_bounds = array<i64: 8, 8, 128>}, {pipeline_mode = #tpu.pipeline_mode<synchronous>, transform_indices = @transform_3, window_bounds = array<i64: 8, 128, 8>}, {pipeline_mode = #tpu.pipeline_mode<synchronous>, transform_indices = @transform_4, window_bounds = array<i64: 128, 384>}, {pipeline_mode = #tpu.pipeline_mode<synchronous>, transform_indices = @transform_5, window_bounds = array<i64: 128, 384>}, {pipeline_mode = #tpu.pipeline_mode<synchronous>, transform_indices = @transform_6, window_bounds = array<i64: 256, 128>}, {pipeline_mode = #tpu.pipeline_mode<synchronous>, transform_indices = @transform_7, window_bounds = array<i64: 128, 128>}, {pipeline_mode = #tpu.pipeline_mode<synchronous>, transform_indices = @transform_8, window_bounds = array<i64: 4, 384>}, {transform_indices = @transform_9, window_bounds = array<i64: 1, 8, 128>}, {pipeline_mode = #tpu.pipeline_mode<synchronous>, transform_indices = @transform_10, window_bounds = array<i64: 8, 128>}]} {
    %c0_i32 = arith.constant 0 : i32
    %0 = arith.cmpi eq, %arg0, %c0_i32 : i32
    %1 = arith.extui %0 : i1 to i32
    %c0_i32_0 = arith.constant 0 : i32
    %2 = arith.cmpi ne, %1, %c0_i32_0 : i32
    scf.if %2 {
      %c0_44 = arith.constant 0 : index
      %c0_45 = arith.constant 0 : index
      %141 = vector.load %arg2[%c0_44, %c0_45] : memref<8x128xf32, #tpu.memory_space<vmem>>, vector<8x128xf32>
      %c0_46 = arith.constant 0 : index
      %c0_47 = arith.constant 0 : index
      %142 = vector.load %arg12[%c0_46, %c0_47] : memref<8x128xf32, #tpu.memory_space<vmem>>, vector<8x128xf32>
      tpu.vector_store %arg12[%c0_46, %c0_47], %141 {strides = array<i32>} : memref<8x128xf32, #tpu.memory_space<vmem>>, vector<8x128xf32>,
    } else {
    }
    %c0 = arith.constant 0 : index
    %c0_1 = arith.constant 0 : index
    %3 = vector.load %arg12[%c0, %c0_1] : memref<8x128xf32, #tpu.memory_space<vmem>>, vector<8x128xf32>
    %c0_2 = arith.constant 0 : index
    %c0_3 = arith.constant 0 : index
    %4 = vector.load %arg10[%c0_2, %c0_3] : memref<4x384xf32, #tpu.memory_space<vmem>>, vector<4x384xf32>
    %5 = tpu.iota {dimensions = array<i32: 1>} : vector<1x128xi32>
    %6 = arith.index_cast %arg0 : i32 to index
    %c0_4 = arith.constant 0 : index
    %7 = memref.load %arg1[%6, %c0_4] : memref<1x8xi32, #tpu.memory_space<smem>>
    %8 = vector.broadcast %7 : i32 to vector<1x128xi32>
    %9 = arith.cmpi eq, %5, %8 : vector<1x128xi32>
    %10 = arith.extui %9 : vector<1x128xi1> to vector<1x128xi32>
    %11 = arith.sitofp %10 : vector<1x128xi32> to vector<1x128xf32>
    %12 = arith.index_cast %arg0 : i32 to index
    %c1 = arith.constant 1 : index
    %13 = memref.load %arg1[%12, %c1] : memref<1x8xi32, #tpu.memory_space<smem>>
    %14 = vector.broadcast %13 : i32 to vector<1x128xi32>
    %15 = arith.cmpi eq, %5, %14 : vector<1x128xi32>
    %16 = arith.extui %15 : vector<1x128xi1> to vector<1x128xi32>
    %17 = arith.sitofp %16 : vector<1x128xi32> to vector<1x128xf32>
    %18 = arith.index_cast %arg0 : i32 to index
    %c2 = arith.constant 2 : index
    %19 = memref.load %arg1[%18, %c2] : memref<1x8xi32, #tpu.memory_space<smem>>
    %20 = vector.broadcast %19 : i32 to vector<1x128xi32>
    %21 = arith.cmpi eq, %5, %20 : vector<1x128xi32>
    %22 = arith.extui %21 : vector<1x128xi1> to vector<1x128xi32>
    %23 = arith.sitofp %22 : vector<1x128xi32> to vector<1x128xf32>
    %24 = arith.index_cast %arg0 : i32 to index
    %c3 = arith.constant 3 : index
    %25 = memref.load %arg1[%24, %c3] : memref<1x8xi32, #tpu.memory_space<smem>>
    %26 = vector.broadcast %25 : i32 to vector<1x128xi32>
    %27 = arith.cmpi eq, %5, %26 : vector<1x128xi32>
    %28 = arith.extui %27 : vector<1x128xi1> to vector<1x128xi32>
    %29 = arith.sitofp %28 : vector<1x128xi32> to vector<1x128xf32>
    %30 = arith.index_cast %arg0 : i32 to index
    %c4 = arith.constant 4 : index
    %31 = memref.load %arg1[%30, %c4] : memref<1x8xi32, #tpu.memory_space<smem>>
    %32 = vector.broadcast %31 : i32 to vector<1x128xi32>
    %33 = arith.cmpi eq, %5, %32 : vector<1x128xi32>
    %34 = arith.extui %33 : vector<1x128xi1> to vector<1x128xi32>
    %35 = arith.sitofp %34 : vector<1x128xi32> to vector<1x128xf32>
    %36 = arith.index_cast %arg0 : i32 to index
    %c5 = arith.constant 5 : index
    %37 = memref.load %arg1[%36, %c5] : memref<1x8xi32, #tpu.memory_space<smem>>
    %38 = vector.broadcast %37 : i32 to vector<1x128xi32>
    %39 = arith.cmpi eq, %5, %38 : vector<1x128xi32>
    %40 = arith.extui %39 : vector<1x128xi1> to vector<1x128xi32>
    %41 = arith.sitofp %40 : vector<1x128xi32> to vector<1x128xf32>
    %42 = arith.index_cast %arg0 : i32 to index
    %c6 = arith.constant 6 : index
    %43 = memref.load %arg1[%42, %c6] : memref<1x8xi32, #tpu.memory_space<smem>>
    %44 = vector.broadcast %43 : i32 to vector<1x128xi32>
    %45 = arith.cmpi eq, %5, %44 : vector<1x128xi32>
    %46 = arith.extui %45 : vector<1x128xi1> to vector<1x128xi32>
    %47 = arith.sitofp %46 : vector<1x128xi32> to vector<1x128xf32>
    %48 = arith.index_cast %arg0 : i32 to index
    %c7 = arith.constant 7 : index
    %49 = memref.load %arg1[%48, %c7] : memref<1x8xi32, #tpu.memory_space<smem>>
    %50 = vector.broadcast %49 : i32 to vector<1x128xi32>
    %51 = arith.cmpi eq, %5, %50 : vector<1x128xi32>
    %52 = arith.extui %51 : vector<1x128xi1> to vector<1x128xi32>
    %53 = arith.sitofp %52 : vector<1x128xi32> to vector<1x128xf32>
    %54 = tpu.concatenate %11, %17, %23, %29, %35, %41, %47, %53 in 0 : vector<1x128xf32>, vector<1x128xf32>, vector<1x128xf32>, vector<1x128xf32>, vector<1x128xf32>, vector<1x128xf32>, vector<1x128xf32>, vector<1x128xf32> -> vector<8x128xf32>
    %c0_5 = arith.constant 0 : index
    %c0_6 = arith.constant 0 : index
    %55 = vector.load %arg3[%c0_5, %c0_6] : memref<128x128xf32, #tpu.memory_space<vmem>>, vector<128x128xf32>
    %cst = arith.constant dense<0.000000e+00> : vector<8x128xf32>
    %56 = tpu.matmul %54, %55, %cst {dimension_numbers = #tpu.dot_dimension_numbers<[1], [0], [0], [1], [0, 0, 1, 1], [], []>} : vector<8x128xf32>, vector<128x128xf32>, vector<8x128xf32> -> vector<8x128xf32>
    %c0_7 = arith.constant 0 : index
    %c0_8 = arith.constant 0 : index
    %57 = vector.load %arg6[%c0_7, %c0_8] : memref<128x384xf32, #tpu.memory_space<vmem>>, vector<128x384xf32>
    %cst_9 = arith.constant dense<0.000000e+00> : vector<8x384xf32>
    %58 = tpu.matmul %56, %57, %cst_9 {dimension_numbers = #tpu.dot_dimension_numbers<[1], [0], [0], [1], [0, 0, 1, 1], [], []>} : vector<8x128xf32>, vector<128x384xf32>, vector<8x384xf32> -> vector<8x384xf32>
    %59 = vector.extract_strided_slice %4 {offsets = [0, 0], sizes = [1, 384], strides = [1, 1]} : vector<4x384xf32> to vector<1x384xf32>
    %60 = vector.broadcast %59 : vector<1x384xf32> to vector<8x384xf32>
    %61 = arith.addf %58, %60 : vector<8x384xf32>
    %c0_10 = arith.constant 0 : index
    %c0_11 = arith.constant 0 : index
    %62 = vector.load %arg7[%c0_10, %c0_11] : memref<128x384xf32, #tpu.memory_space<vmem>>, vector<128x384xf32>
    %cst_12 = arith.constant dense<0.000000e+00> : vector<8x384xf32>
    %63 = tpu.matmul %3, %62, %cst_12 {dimension_numbers = #tpu.dot_dimension_numbers<[1], [0], [0], [1], [0, 0, 1, 1], [], []>} : vector<8x128xf32>, vector<128x384xf32>, vector<8x384xf32> -> vector<8x384xf32>
    %64 = vector.extract_strided_slice %4 {offsets = [1, 0], sizes = [1, 384], strides = [1, 1]} : vector<4x384xf32> to vector<1x384xf32>
    %65 = vector.broadcast %64 : vector<1x384xf32> to vector<8x384xf32>
    %66 = arith.addf %63, %65 : vector<8x384xf32>
    %67 = vector.extract_strided_slice %61 {offsets = [0, 0], sizes = [8, 128], strides = [1, 1]} : vector<8x384xf32> to vector<8x128xf32>
    %68 = vector.extract_strided_slice %66 {offsets = [0, 0], sizes = [8, 128], strides = [1, 1]} : vector<8x384xf32> to vector<8x128xf32>
    %69 = arith.addf %67, %68 : vector<8x128xf32>
    %cst_13 = arith.constant 0.000000e+00 : f32
    %70 = vector.broadcast %cst_13 : f32 to vector<8x128xf32>
    %71 = arith.subf %70, %69 : vector<8x128xf32>
    %72 = math.exp %71 : vector<8x128xf32>
    %cst_14 = arith.constant 1.000000e+00 : f32
    %73 = vector.broadcast %cst_14 : f32 to vector<8x128xf32>
    %74 = arith.addf %73, %72 : vector<8x128xf32>
    %cst_15 = arith.constant 1.000000e+00 : f32
    %75 = vector.broadcast %cst_15 : f32 to vector<8x128xf32>
    %76 = arith.divf %75, %74 : vector<8x128xf32>
    %77 = vector.extract_strided_slice %61 {offsets = [0, 128], sizes = [8, 128], strides = [1, 1]} : vector<8x384xf32> to vector<8x128xf32>
    %78 = vector.extract_strided_slice %66 {offsets = [0, 128], sizes = [8, 128], strides = [1, 1]} : vector<8x384xf32> to vector<8x128xf32>
    %79 = arith.addf %77, %78 : vector<8x128xf32>
    %cst_16 = arith.constant 0.000000e+00 : f32
    %80 = vector.broadcast %cst_16 : f32 to vector<8x128xf32>
    %81 = arith.subf %80, %79 : vector<8x128xf32>
    %82 = math.exp %81 : vector<8x128xf32>
    %cst_17 = arith.constant 1.000000e+00 : f32
    %83 = vector.broadcast %cst_17 : f32 to vector<8x128xf32>
    %84 = arith.addf %83, %82 : vector<8x128xf32>
    %cst_18 = arith.constant 1.000000e+00 : f32
    %85 = vector.broadcast %cst_18 : f32 to vector<8x128xf32>
    %86 = arith.divf %85, %84 : vector<8x128xf32>
    %87 = vector.extract_strided_slice %61 {offsets = [0, 256], sizes = [8, 128], strides = [1, 1]} : vector<8x384xf32> to vector<8x128xf32>
    %88 = vector.extract_strided_slice %66 {offsets = [0, 256], sizes = [8, 128], strides = [1, 1]} : vector<8x384xf32> to vector<8x128xf32>
    %89 = arith.mulf %76, %88 : vector<8x128xf32>
    %90 = arith.addf %87, %89 : vector<8x128xf32>
    %91 = math.tanh %90 : vector<8x128xf32>
    %cst_19 = arith.constant 1.000000e+00 : f32
    %92 = vector.broadcast %cst_19 : f32 to vector<8x128xf32>
    %93 = arith.subf %92, %86 : vector<8x128xf32>
    %94 = arith.mulf %93, %91 : vector<8x128xf32>
    %95 = arith.mulf %86, %3 : vector<8x128xf32>
    %96 = arith.addf %94, %95 : vector<8x128xf32>
    %97 = vector.shape_cast %96 : vector<8x128xf32> to vector<8x1x128xf32>
    %c0_20 = arith.constant 0 : index
    %c0_21 = arith.constant 0 : index
    %c0_22 = arith.constant 0 : index
    %98 = vector.load %arg5[%c0_20, %c0_21, %c0_22] : memref<8x128x8xf32, #tpu.memory_space<vmem>>, vector<8x128x8xf32>
    "tpu.trace_start"() <{level = 10 : i32, message = "bqh,bhl->bql"}> : () -> ()
    %cst_23 = arith.constant dense<0.000000e+00> : vector<8x1x8xf32>
    %99 = tpu.matmul %97, %98, %cst_23 {dimension_numbers = #tpu.dot_dimension_numbers<[2], [1], [1], [2], [0, 0, 0, 1, 1, 2], [0], [0]>} : vector<8x1x128xf32>, vector<8x128x8xf32>, vector<8x1x8xf32> -> vector<8x1x8xf32>
    "tpu.trace_stop"() : () -> ()
    %cst_24 = arith.constant dense<0xFF800000> : vector<8x1xf32>
    %100 = vector.multi_reduction <maximumf>, %99, %cst_24 [2] : vector<8x1x8xf32> to vector<8x1xf32>
    %101 = vector.shape_cast %100 : vector<8x1xf32> to vector<8x1x1xf32>
    %102 = vector.broadcast %101 : vector<8x1x1xf32> to vector<8x1x8xf32>
    %103 = arith.subf %99, %102 : vector<8x1x8xf32>
    %104 = math.exp %103 : vector<8x1x8xf32>
    %cst_25 = arith.constant dense<0.000000e+00> : vector<8x1xf32>
    %105 = vector.multi_reduction <add>, %104, %cst_25 [2] : vector<8x1x8xf32> to vector<8x1xf32>
    %106 = vector.shape_cast %105 : vector<8x1xf32> to vector<8x1x1xf32>
    %107 = tpu.reciprocal %106 {approx = true} : vector<8x1x1xf32> -> vector<8x1x1xf32>
    %108 = vector.broadcast %107 : vector<8x1x1xf32> to vector<8x1x8xf32>
    %109 = arith.mulf %104, %108 : vector<8x1x8xf32>
    %c0_26 = arith.constant 0 : index
    %c0_27 = arith.constant 0 : index
    %c0_28 = arith.constant 0 : index
    %110 = vector.load %arg4[%c0_26, %c0_27, %c0_28] : memref<8x8x128xf32, #tpu.memory_space<vmem>>, vector<8x8x128xf32>
    "tpu.trace_start"() <{level = 10 : i32, message = "bql,blh->bqh"}> : () -> ()
    %cst_29 = arith.constant dense<0.000000e+00> : vector<8x1x128xf32>
    %111 = tpu.matmul %109, %110, %cst_29 {dimension_numbers = #tpu.dot_dimension_numbers<[2], [1], [1], [2], [0, 0, 0, 1, 1, 2], [0], [0]>} : vector<8x1x8xf32>, vector<8x8x128xf32>, vector<8x1x128xf32> -> vector<8x1x128xf32>
    "tpu.trace_stop"() : () -> ()
    %112 = vector.shape_cast %111 : vector<8x1x128xf32> to vector<8x128xf32>
    %c0_30 = arith.constant 0 : index
    %c0_31 = arith.constant 0 : index
    %113 = vector.load %arg8[%c0_30, %c0_31] : memref<256x128xf32, #tpu.memory_space<vmem>>, vector<256x128xf32>
    %114 = vector.extract_strided_slice %113 {offsets = [0, 0], sizes = [128, 128], strides = [1, 1]} : vector<256x128xf32> to vector<128x128xf32>
    %cst_32 = arith.constant dense<0.000000e+00> : vector<8x128xf32>
    %115 = tpu.matmul %96, %114, %cst_32 {dimension_numbers = #tpu.dot_dimension_numbers<[1], [0], [0], [1], [0, 0, 1, 1], [], []>} : vector<8x128xf32>, vector<128x128xf32>, vector<8x128xf32> -> vector<8x128xf32>
    %116 = vector.extract_strided_slice %113 {offsets = [128, 0], sizes = [128, 128], strides = [1, 1]} : vector<256x128xf32> to vector<128x128xf32>
    %cst_33 = arith.constant dense<0.000000e+00> : vector<8x128xf32>
    %117 = tpu.matmul %112, %116, %cst_33 {dimension_numbers = #tpu.dot_dimension_numbers<[1], [0], [0], [1], [0, 0, 1, 1], [], []>} : vector<8x128xf32>, vector<128x128xf32>, vector<8x128xf32> -> vector<8x128xf32>
    %118 = arith.addf %115, %117 : vector<8x128xf32>
    %119 = vector.extract_strided_slice %4 {offsets = [2, 0], sizes = [1, 128], strides = [1, 1]} : vector<4x384xf32> to vector<1x128xf32>
    %120 = vector.broadcast %119 : vector<1x128xf32> to vector<8x128xf32>
    %121 = arith.addf %118, %120 : vector<8x128xf32>
    %122 = math.tanh %121 : vector<8x128xf32>
    %c0_34 = arith.constant 0 : index
    %c0_35 = arith.constant 0 : index
    %123 = vector.load %arg9[%c0_34, %c0_35] : memref<128x128xf32, #tpu.memory_space<vmem>>, vector<128x128xf32>
    %cst_36 = arith.constant dense<0.000000e+00> : vector<8x128xf32>
    %124 = tpu.matmul %122, %123, %cst_36 {dimension_numbers = #tpu.dot_dimension_numbers<[1], [0], [0], [1], [0, 0, 1, 1], [], []>} : vector<8x128xf32>, vector<128x128xf32>, vector<8x128xf32> -> vector<8x128xf32>
    %125 = vector.extract_strided_slice %4 {offsets = [3, 0], sizes = [1, 128], strides = [1, 1]} : vector<4x384xf32> to vector<1x128xf32>
    %126 = vector.broadcast %125 : vector<1x128xf32> to vector<8x128xf32>
    %127 = arith.addf %124, %126 : vector<8x128xf32>
    %cst_37 = arith.constant dense<0xFF800000> : vector<8xf32>
    %128 = vector.multi_reduction <maximumf>, %127, %cst_37 [1] : vector<8x128xf32> to vector<8xf32>
    %129 = vector.shape_cast %128 : vector<8xf32> to vector<8x1xf32>
    %130 = vector.broadcast %129 : vector<8x1xf32> to vector<8x128xf32>
    %131 = arith.subf %127, %130 : vector<8x128xf32>
    %132 = math.exp %131 : vector<8x128xf32>
    %cst_38 = arith.constant dense<0.000000e+00> : vector<8xf32>
    %133 = vector.multi_reduction <add>, %132, %cst_38 [1] : vector<8x128xf32> to vector<8xf32>
    %134 = vector.shape_cast %133 : vector<8xf32> to vector<8x1xf32>
    %135 = tpu.reciprocal %134 {approx = true} : vector<8x1xf32> -> vector<8x1xf32>
    %136 = vector.broadcast %135 : vector<8x1xf32> to vector<8x128xf32>
    %137 = arith.mulf %132, %136 : vector<8x128xf32>
    %138 = vector.shape_cast %137 : vector<8x128xf32> to vector<1x8x128xf32>
    %c0_39 = arith.constant 0 : index
    %c0_40 = arith.constant 0 : index
    %c0_41 = arith.constant 0 : index
    %139 = vector.load %arg11[%c0_39, %c0_40, %c0_41] : memref<1x8x128xf32, #tpu.memory_space<vmem>>, vector<1x8x128xf32>
    tpu.vector_store %arg11[%c0_39, %c0_40, %c0_41], %138 {strides = array<i32>} : memref<1x8x128xf32, #tpu.memory_space<vmem>>, vector<1x8x128xf32>,
    %c0_42 = arith.constant 0 : index
    %c0_43 = arith.constant 0 : index
    %140 = vector.load %arg12[%c0_42, %c0_43] : memref<8x128xf32, #tpu.memory_space<vmem>>, vector<8x128xf32>
    tpu.vector_store %arg12[%c0_42, %c0_43], %96 {strides = array<i32>} : memref<8x128xf32, #tpu.memory_space<vmem>>, vector<8x128xf32>,
    return
  }
  func.func @transform_0(%arg0: i32, %arg1: memref<1x8xi32, #tpu.memory_space<smem>>) -> (i32, i32) {
    %c0_i32 = arith.constant 0 : i32
    %c0_i32_0 = arith.constant 0 : i32
    %c0_i32_1 = arith.constant 0 : i32
    return %c0_i32, %c0_i32_0 : i32, i32
  }
  func.func @transform_1(%arg0: i32, %arg1: memref<1x8xi32, #tpu.memory_space<smem>>) -> (i32, i32) {
    %c0_i32 = arith.constant 0 : i32
    %c0_i32_0 = arith.constant 0 : i32
    %c0_i32_1 = arith.constant 0 : i32
    return %c0_i32, %c0_i32_0 : i32, i32
  }
  func.func @transform_2(%arg0: i32, %arg1: memref<1x8xi32, #tpu.memory_space<smem>>) -> (i32, i32, i32) {
    %c0_i32 = arith.constant 0 : i32
    %c0_i32_0 = arith.constant 0 : i32
    %c0_i32_1 = arith.constant 0 : i32
    %c0_i32_2 = arith.constant 0 : i32
    return %c0_i32, %c0_i32_0, %c0_i32_1 : i32, i32, i32
  }
  func.func @transform_3(%arg0: i32, %arg1: memref<1x8xi32, #tpu.memory_space<smem>>) -> (i32, i32, i32) {
    %c0_i32 = arith.constant 0 : i32
    %c0_i32_0 = arith.constant 0 : i32
    %c0_i32_1 = arith.constant 0 : i32
    %c0_i32_2 = arith.constant 0 : i32
    return %c0_i32, %c0_i32_0, %c0_i32_1 : i32, i32, i32
  }
  func.func @transform_4(%arg0: i32, %arg1: memref<1x8xi32, #tpu.memory_space<smem>>) -> (i32, i32) {
    %c0_i32 = arith.constant 0 : i32
    %c0_i32_0 = arith.constant 0 : i32
    %c0_i32_1 = arith.constant 0 : i32
    return %c0_i32, %c0_i32_0 : i32, i32
  }
  func.func @transform_5(%arg0: i32, %arg1: memref<1x8xi32, #tpu.memory_space<smem>>) -> (i32, i32) {
    %c0_i32 = arith.constant 0 : i32
    %c0_i32_0 = arith.constant 0 : i32
    %c0_i32_1 = arith.constant 0 : i32
    return %c0_i32, %c0_i32_0 : i32, i32
  }
  func.func @transform_6(%arg0: i32, %arg1: memref<1x8xi32, #tpu.memory_space<smem>>) -> (i32, i32) {
    %c0_i32 = arith.constant 0 : i32
    %c0_i32_0 = arith.constant 0 : i32
    %c0_i32_1 = arith.constant 0 : i32
    return %c0_i32, %c0_i32_0 : i32, i32
  }
  func.func @transform_7(%arg0: i32, %arg1: memref<1x8xi32, #tpu.memory_space<smem>>) -> (i32, i32) {
    %c0_i32 = arith.constant 0 : i32
    %c0_i32_0 = arith.constant 0 : i32
    %c0_i32_1 = arith.constant 0 : i32
    return %c0_i32, %c0_i32_0 : i32, i32
  }
  func.func @transform_8(%arg0: i32, %arg1: memref<1x8xi32, #tpu.memory_space<smem>>) -> (i32, i32) {
    %c0_i32 = arith.constant 0 : i32
    %c0_i32_0 = arith.constant 0 : i32
    %c0_i32_1 = arith.constant 0 : i32
    return %c0_i32, %c0_i32_0 : i32, i32
  }
  func.func @transform_9(%arg0: i32, %arg1: memref<1x8xi32, #tpu.memory_space<smem>>) -> (i32, i32, i32) {
    %c0_i32 = arith.constant 0 : i32
    %c0_i32_0 = arith.constant 0 : i32
    %c0_i32_1 = arith.constant 0 : i32
    return %arg0, %c0_i32, %c0_i32_0 : i32, i32, i32
  }
  func.func @transform_10(%arg0: i32, %arg1: memref<1x8xi32, #tpu.memory_space<smem>>) -> (i32, i32) {
    %c0_i32 = arith.constant 0 : i32
    %c0_i32_0 = arith.constant 0 : i32
    %c0_i32_1 = arith.constant 0 : i32
    return %c0_i32, %c0_i32_0 : i32, i32
  }
}

</mosaic_0001>

<llo_original>
// kernel: luong_attn_decoder_step.1
$region0: #{luong_attn_decoder_step.1}
  #allocation0 [shape = 'u32[]', space=smem, size = 0x4, offset = 0x4, fixed_abs, tag = 'smem constant byte address 0x4 - core index']
  #allocation1 [shape = 'u32[72,128]{1,0:T(1,128)}', space=vmem, size = 0x9000, scoped, tag = 'internal scratch']
  #allocation2 [shape = 's32[1]{0}', space=sflag, size = 0x4, scoped, tag = 'scoped memory for luong_attn_decoder_step.1']
  #allocation3 [shape = 'u8[512]{0}', space=smem, size = 0x200, scoped, tag = 'prefetched SMEM operand 0']
  %s0 = inlined_call_operand.vmem [shape: s32[1,8], index: 0, kind: input, shape index: {}]
  %s1 = inlined_call_operand.vmem [shape: f32[8,128], index: 1, kind: input, shape index: {}]
  %s2 = inlined_call_operand.vmem [shape: f32[128,128], index: 2, kind: input, shape index: {}]
  %s3 = inlined_call_operand.vmem [shape: f32[8,8,128], index: 3, kind: input, shape index: {}]
  %s4 = inlined_call_operand.vmem [shape: f32[8,128,8], index: 4, kind: input, shape index: {}]
  %s5 = inlined_call_operand.vmem [shape: f32[128,384], index: 5, kind: input, shape index: {}]
  %s6 = inlined_call_operand.vmem [shape: f32[128,384], index: 6, kind: input, shape index: {}]
  %s7 = inlined_call_operand.vmem [shape: f32[256,128], index: 7, kind: input, shape index: {}]
  %s8 = inlined_call_operand.hbm [shape: f32[128,128], index: 8, kind: input, shape index: {}]
  %s9 = inlined_call_operand.vmem [shape: f32[4,384], index: 9, kind: input, shape index: {}]
  %s10 = inlined_call_operand.vmem [shape: f32[1,8,128], index: 10, kind: output, shape index: {0}]
  %s11 = inlined_call_operand.vmem [shape: f32[8,128], index: 11, kind: output, shape index: {1}]
  %12 = xla_tuple %s10, %s11
  %s13 = sld [smem:[#allocation0]]
  $region62: #{luong_attn_decoder_step.1} parent=0
    _
  %s15 = ssub.s32 1, %s13
  %s16 = scalar_select 0, %s15, %s13
  %s18 = sshll.u32 %s0, 4
  %s19 = int_to_ptr.vmem [resolvable:$true] %s18
  %21 = dma.vmem_to_smem %s19, 16, [#allocation3], [#allocation2]
  %23 = dma.done [#allocation2], 16
  %24 = sfence
  $region1: #{luong_attn_decoder_step.1} parent=0
    #allocation4 [shape = 'u8[65536]{0}', space=vmem, size = 0x10000, scoped, tag = 'input window, operand 8, single buffered']
    #allocation5 [shape = 's32[1]{0}', space=sflag, size = 0x4, scoped, tag = 'scoped memory for luong_attn_decoder_step.1']
    %25 = vsyncpa [#allocation5], 0
    // Predicated region
    $region2: #{luong_attn_decoder_step.1} parent=1 // pred_check
      _
    $region3: #{luong_attn_decoder_step.1} parent=1 // pred_check_branch
      %27 = sbr.rel (0) target = $region5
    $region4: #{luong_attn_decoder_step.1} parent=1 // pred_region
      _
    $region5: #{luong_attn_decoder_step.1} parent=1 // pred_fallthru
      _
    // Predicated region
    $region6: #{luong_attn_decoder_step.1} parent=1 // pred_check
      _
    $region7: #{luong_attn_decoder_step.1} parent=1 // pred_check_branch
      %29 = sbr.rel (0) target = $region9
    $region8: #{luong_attn_decoder_step.1} parent=1 // pred_region
      _
    $region9: #{luong_attn_decoder_step.1} parent=1 // pred_fallthru
      _
    // Predicated region
    $region10: #{luong_attn_decoder_step.1} parent=1 // pred_check
      _
    $region11: #{luong_attn_decoder_step.1} parent=1 // pred_check_branch
      %31 = sbr.rel (0) target = $region13
    $region12: #{luong_attn_decoder_step.1} parent=1 // pred_region
      _
    $region13: #{luong_attn_decoder_step.1} parent=1 // pred_fallthru
      _
    // Predicated region
    $region14: #{luong_attn_decoder_step.1} parent=1 // pred_check
      _
    $region15: #{luong_attn_decoder_step.1} parent=1 // pred_check_branch
      %33 = sbr.rel (0) target = $region17
    $region16: #{luong_attn_decoder_step.1} parent=1 // pred_region
      _
    $region17: #{luong_attn_decoder_step.1} parent=1 // pred_fallthru
      _
    // Predicated region
    $region18: #{luong_attn_decoder_step.1} parent=1 // pred_check
      _
    $region19: #{luong_attn_decoder_step.1} parent=1 // pred_check_branch
      %35 = sbr.rel (0) target = $region21
    $region20: #{luong_attn_decoder_step.1} parent=1 // pred_region
      _
    $region21: #{luong_attn_decoder_step.1} parent=1 // pred_fallthru
      _
    // Predicated region
    $region22: #{luong_attn_decoder_step.1} parent=1 // pred_check
      _
    $region23: #{luong_attn_decoder_step.1} parent=1 // pred_check_branch
      %37 = sbr.rel (0) target = $region25
    $region24: #{luong_attn_decoder_step.1} parent=1 // pred_region
      _
    $region25: #{luong_attn_decoder_step.1} parent=1 // pred_fallthru
      _
    // Predicated region
    $region26: #{luong_attn_decoder_step.1} parent=1 // pred_check
      _
    $region27: #{luong_attn_decoder_step.1} parent=1 // pred_check_branch
      %39 = sbr.rel (0) target = $region29
    $region28: #{luong_attn_decoder_step.1} parent=1 // pred_region
      _
    $region29: #{luong_attn_decoder_step.1} parent=1 // pred_fallthru
      _
    // Predicated region
    $region30: #{luong_attn_decoder_step.1} parent=1 // pred_check
      _
    $region31: #{luong_attn_decoder_step.1} parent=1 // pred_check_branch
      %41 = sbr.rel (0) target = $region33
    $region32: #{luong_attn_decoder_step.1} parent=1 // pred_region
      %43 = vsyncadd [#allocation5], 0
      %s44 = sshll.u32 %s8, 4
      %s45 = int_to_ptr.hbm [resolvable:$true] %s44
      %s46 = sshll.u32 [#allocation4], 4
      %s47 = int_to_ptr.vmem [resolvable:$true] %s46
      %52 = dma.hbm_to_vmem [thread:$0]  %s45, 2048, %s47, [#allocation5], 128, 128, 8
    $region33: #{luong_attn_decoder_step.1} parent=1 // pred_fallthru
      _
    // Predicated region
    $region34: #{luong_attn_decoder_step.1} parent=1 // pred_check
      _
    $region35: #{luong_attn_decoder_step.1} parent=1 // pred_check_branch
      %54 = sbr.rel (0) target = $region37
    $region36: #{luong_attn_decoder_step.1} parent=1 // pred_region
      _
    $region37: #{luong_attn_decoder_step.1} parent=1 // pred_fallthru
      _
    // Predicated region
    $region38: #{luong_attn_decoder_step.1} parent=1 // pred_check
      _
    $region39: #{luong_attn_decoder_step.1} parent=1 // pred_check_branch
      %56 = sbr.rel (0) target = $region41
    $region40: #{luong_attn_decoder_step.1} parent=1 // pred_region
      %58 = dma.done [#allocation5], 2048
    $region41: #{luong_attn_decoder_step.1} parent=1 // pred_fallthru
      _
    %p59 = scmp.eq.s32.totalorder 0, 0
    // Predicated region
    $region42: #{luong_attn_decoder_step.1} parent=1 // pred_check
      %p60 = pneg %p59
    $region43: #{luong_attn_decoder_step.1} parent=1 // pred_check_branch
      %62 = sbr.rel (%p60) target = $region45
    $region44: #{luong_attn_decoder_step.1} parent=1 // pred_region
      %v63 = vld [vmem:[%s1] sm:$0xff]
      %64 = vst [vmem:[%s11] sm:$0xff] %v63
    $region45: #{luong_attn_decoder_step.1} parent=1 // pred_fallthru
      _
    %v65 = vld [vmem:[%s11] sm:$0xff]
    %v66 = vld [vmem:[%s9] sm:$0xff]
    %v67 = vld [vmem:[%s9 + $0x8] sm:$0xf]
    %v68 = vlaneseq
    %v69 = vand.u32 %v68, 127
    %s70 = smul.u32 0, 128
    %s71 = sld [smem:[#allocation3 + %s70]]
    %v72 = vstv %s71
    %vm73 = vcmp.eq.s32.totalorder %v69, %v72
    %v74 = vsel %vm73, 1, 0
    %v75 = vcvt.s32.f32 %v74
    %s76 = sadd.s32 %s70, 1
    %s77 = sld [smem:[#allocation3 + %s76]]
    %v78 = vstv %s77
    %vm79 = vcmp.eq.s32.totalorder %v69, %v78
    %v80 = vsel %vm79, 1, 0
    %v81 = vcvt.s32.f32 %v80
    %s82 = sadd.s32 %s70, 2
    %s83 = sld [smem:[#allocation3 + %s82]]
    %v84 = vstv %s83
    %vm85 = vcmp.eq.s32.totalorder %v69, %v84
    %v86 = vsel %vm85, 1, 0
    %v87 = vcvt.s32.f32 %v86
    %s88 = sadd.s32 %s70, 3
    %s89 = sld [smem:[#allocation3 + %s88]]
    %v90 = vstv %s89
    %vm91 = vcmp.eq.s32.totalorder %v69, %v90
    %v92 = vsel %vm91, 1, 0
    %v93 = vcvt.s32.f32 %v92
    %s94 = sadd.s32 %s70, 4
    %s95 = sld [smem:[#allocation3 + %s94]]
    %v96 = vstv %s95
    %vm97 = vcmp.eq.s32.totalorder %v69, %v96
    %v98 = vsel %vm97, 1, 0
    %v99 = vcvt.s32.f32 %v98
    %s100 = sadd.s32 %s70, 5
    %s101 = sld [smem:[#allocation3 + %s100]]
    %v102 = vstv %s101
    %vm103 = vcmp.eq.s32.totalorder %v69, %v102
    %v104 = vsel %vm103, 1, 0
    %v105 = vcvt.s32.f32 %v104
    %s106 = sadd.s32 %s70, 6
    %s107 = sld [smem:[#allocation3 + %s106]]
    %v108 = vstv %s107
    %vm109 = vcmp.eq.s32.totalorder %v69, %v108
    %v110 = vsel %vm109, 1, 0
    %v111 = vcvt.s32.f32 %v110
    %s112 = sadd.s32 %s70, 7
    %s113 = sld [smem:[#allocation3 + %s112]]
    %v114 = vstv %s113
    %vm115 = vcmp.eq.s32.totalorder %v69, %v114
    %v116 = vsel %vm115, 1, 0
    %v117 = vcvt.s32.f32 %v116
    %vm118 = vcmask 1040384
    %v119 = vsel %vm118, %v75, %v81
    %vm120 = vcmask 1041408
    %v121 = vsel %vm120, %v119, %v87
    %vm122 = vcmask 1042432
    %v123 = vsel %vm122, %v121, %v93
    %vm124 = vcmask 1043456
    %v125 = vsel %vm124, %v123, %v99
    %vm126 = vcmask 1044480
    %v127 = vsel %vm126, %v125, %v105
    %vm128 = vcmask 1045504
    %v129 = vsel %vm128, %v127, %v111
    %vm130 = vcmask 1046528
    %v131 = vsel %vm130, %v129, %v117
    %v132 = vld [vmem:[%s2] sm:$0xff]
    %v133 = vld [vmem:[%s2 + $0x8] sm:$0xff]
    %v134 = vld [vmem:[%s2 + $0x10] sm:$0xff]
    %v135 = vld [vmem:[%s2 + $0x18] sm:$0xff]
    %v136 = vld [vmem:[%s2 + $0x20] sm:$0xff]
    %v137 = vld [vmem:[%s2 + $0x28] sm:$0xff]
    %v138 = vld [vmem:[%s2 + $0x30] sm:$0xff]
    %v139 = vld [vmem:[%s2 + $0x38] sm:$0xff]
    %v140 = vld [vmem:[%s2 + $0x40] sm:$0xff]
    %v141 = vld [vmem:[%s2 + $0x48] sm:$0xff]
    %v142 = vld [vmem:[%s2 + $0x50] sm:$0xff]
    %v143 = vld [vmem:[%s2 + $0x58] sm:$0xff]
    %v144 = vld [vmem:[%s2 + $0x60] sm:$0xff]
    %v145 = vld [vmem:[%s2 + $0x68] sm:$0xff]
    %v146 = vld [vmem:[%s2 + $0x70] sm:$0xff]
    %v147 = vld [vmem:[%s2 + $0x78] sm:$0xff]
    %148 = vmatpush.msra.mxu0 %v147
    %149 = vmatpush.msra.mxu0 %v146
    %150 = vmatpush.msra.mxu0 %v145
    %151 = vmatpush.msra.mxu0 %v144
    %152 = vmatpush.msra.mxu0 %v143
    %153 = vmatpush.msra.mxu0 %v142
    %154 = vmatpush.msra.mxu0 %v141
    %155 = vmatpush.msra.mxu0 %v140
    %156 = vmatpush.msra.mxu0 %v139
    %157 = vmatpush.msra.mxu0 %v138
    %158 = vmatpush.msra.mxu0 %v137
    %159 = vmatpush.msra.mxu0 %v136
    %160 = vmatpush.msra.mxu0 %v135
    %161 = vmatpush.msra.mxu0 %v134
    %162 = vmatpush.msra.mxu0 %v133
    %163 = vmatpush.msra.mxu0 %v132
    %164 = vmatmul.f32.gmra.mxu0 %v131
    %v165 = vpop.f32.mrf.mxu0
    %v166 = vadd.f32 0.0, %v165
    %167 = vdwg.mxu0
    %v168 = vld [vmem:[%s5] sm:$0xff]
    %v169 = vld [vmem:[%s5 + $0x8] sm:$0xff]
    %v170 = vld [vmem:[%s5 + $0x10] sm:$0xff]
    %v171 = vld [vmem:[%s5 + $0x18] sm:$0xff]
    %v172 = vld [vmem:[%s5 + $0x20] sm:$0xff]
    %v173 = vld [vmem:[%s5 + $0x28] sm:$0xff]
    %v174 = vld [vmem:[%s5 + $0x30] sm:$0xff]
    %v175 = vld [vmem:[%s5 + $0x38] sm:$0xff]
    %v176 = vld [vmem:[%s5 + $0x40] sm:$0xff]
    %v177 = vld [vmem:[%s5 + $0x48] sm:$0xff]
    %v178 = vld [vmem:[%s5 + $0x50] sm:$0xff]
    %v179 = vld [vmem:[%s5 + $0x58] sm:$0xff]
    %v180 = vld [vmem:[%s5 + $0x60] sm:$0xff]
    %v181 = vld [vmem:[%s5 + $0x68] sm:$0xff]
    %v182 = vld [vmem:[%s5 + $0x70] sm:$0xff]
    %v183 = vld [vmem:[%s5 + $0x78] sm:$0xff]
    %v184 = vld [vmem:[%s5 + $0x80] sm:$0xff]
    %v185 = vld [vmem:[%s5 + $0x88] sm:$0xff]
    %v186 = vld [vmem:[%s5 + $0x90] sm:$0xff]
    %v187 = vld [vmem:[%s5 + $0x98] sm:$0xff]
    %v188 = vld [vmem:[%s5 + $0xa0] sm:$0xff]
    %v189 = vld [vmem:[%s5 + $0xa8] sm:$0xff]
    %v190 = vld [vmem:[%s5 + $0xb0] sm:$0xff]
    %v191 = vld [vmem:[%s5 + $0xb8] sm:$0xff]
    %v192 = vld [vmem:[%s5 + $0xc0] sm:$0xff]
    %v193 = vld [vmem:[%s5 + $0xc8] sm:$0xff]
    %v194 = vld [vmem:[%s5 + $0xd0] sm:$0xff]
    %v195 = vld [vmem:[%s5 + $0xd8] sm:$0xff]
    %v196 = vld [vmem:[%s5 + $0xe0] sm:$0xff]
    %v197 = vld [vmem:[%s5 + $0xe8] sm:$0xff]
    %v198 = vld [vmem:[%s5 + $0xf0] sm:$0xff]
    %v199 = vld [vmem:[%s5 + $0xf8] sm:$0xff]
    %v200 = vld [vmem:[%s5 + $0x100] sm:$0xff]
    %v201 = vld [vmem:[%s5 + $0x108] sm:$0xff]
    %v202 = vld [vmem:[%s5 + $0x110] sm:$0xff]
    %v203 = vld [vmem:[%s5 + $0x118] sm:$0xff]
    %v204 = vld [vmem:[%s5 + $0x120] sm:$0xff]
    %v205 = vld [vmem:[%s5 + $0x128] sm:$0xff]
    %v206 = vld [vmem:[%s5 + $0x130] sm:$0xff]
    %v207 = vld [vmem:[%s5 + $0x138] sm:$0xff]
    %v208 = vld [vmem:[%s5 + $0x140] sm:$0xff]
    %v209 = vld [vmem:[%s5 + $0x148] sm:$0xff]
    %v210 = vld [vmem:[%s5 + $0x150] sm:$0xff]
    %v211 = vld [vmem:[%s5 + $0x158] sm:$0xff]
    %v212 = vld [vmem:[%s5 + $0x160] sm:$0xff]
    %v213 = vld [vmem:[%s5 + $0x168] sm:$0xff]
    %v214 = vld [vmem:[%s5 + $0x170] sm:$0xff]
    %v215 = vld [vmem:[%s5 + $0x178] sm:$0xff]
    %v218 = vperm.slane %v66, 0
    %v219 = vperm.slane %v66, 4
    %v220 = vperm.slane %v67, 0
    %v224 = vperm.slane %v218, 0
    %v225 = vperm.slane %v219, 0
    %v226 = vperm.slane %v220, 0
    %227 = vmatpush.msra.mxu0 %v213
    %228 = vmatpush.msra.mxu0 %v210
    %229 = vmatpush.msra.mxu0 %v207
    %230 = vmatpush.msra.mxu0 %v204
    %231 = vmatpush.msra.mxu0 %v201
    %232 = vmatpush.msra.mxu0 %v198
    %233 = vmatpush.msra.mxu0 %v195
    %234 = vmatpush.msra.mxu0 %v192
    %235 = vmatpush.msra.mxu0 %v189
    %236 = vmatpush.msra.mxu0 %v186
    %237 = vmatpush.msra.mxu0 %v183
    %238 = vmatpush.msra.mxu0 %v180
    %239 = vmatpush.msra.mxu0 %v177
    %240 = vmatpush.msra.mxu0 %v174
    %241 = vmatpush.msra.mxu0 %v171
    %242 = vmatpush.msra.mxu0 %v168
    %243 = vmatmul.f32.gmra.mxu0 %v166
    %v244 = vpop.f32.mrf.mxu0
    %v245 = vadd.f32 %v224, %v244
    %246 = vdwg.mxu0
    %247 = vmatpush.msra.mxu0 %v214
    %248 = vmatpush.msra.mxu0 %v211
    %249 = vmatpush.msra.mxu0 %v208
    %250 = vmatpush.msra.mxu0 %v205
    %251 = vmatpush.msra.mxu0 %v202
    %252 = vmatpush.msra.mxu0 %v199
    %253 = vmatpush.msra.mxu0 %v196
    %254 = vmatpush.msra.mxu0 %v193
    %255 = vmatpush.msra.mxu0 %v190
    %256 = vmatpush.msra.mxu0 %v187
    %257 = vmatpush.msra.mxu0 %v184
    %258 = vmatpush.msra.mxu0 %v181
    %259 = vmatpush.msra.mxu0 %v178
    %260 = vmatpush.msra.mxu0 %v175
    %261 = vmatpush.msra.mxu0 %v172
    %262 = vmatpush.msra.mxu0 %v169
    %263 = vmatmul.f32.gmra.mxu0 %v166
    %v264 = vpop.f32.mrf.mxu0
    %v265 = vadd.f32 %v225, %v264
    %266 = vdwg.mxu0
    %267 = vmatpush.msra.mxu0 %v215
    %268 = vmatpush.msra.mxu0 %v212
    %269 = vmatpush.msra.mxu0 %v209
    %270 = vmatpush.msra.mxu0 %v206
    %271 = vmatpush.msra.mxu0 %v203
    %272 = vmatpush.msra.mxu0 %v200
    %273 = vmatpush.msra.mxu0 %v197
    %274 = vmatpush.msra.mxu0 %v194
    %275 = vmatpush.msra.mxu0 %v191
    %276 = vmatpush.msra.mxu0 %v188
    %277 = vmatpush.msra.mxu0 %v185
    %278 = vmatpush.msra.mxu0 %v182
    %279 = vmatpush.msra.mxu0 %v179
    %280 = vmatpush.msra.mxu0 %v176
    %281 = vmatpush.msra.mxu0 %v173
    %282 = vmatpush.msra.mxu0 %v170
    %283 = vmatmul.f32.gmra.mxu0 %v166
    %v284 = vpop.f32.mrf.mxu0
    %v285 = vadd.f32 %v226, %v284
    %286 = vdwg.mxu0
    %v287 = vld [vmem:[%s6] sm:$0xff]
    %v288 = vld [vmem:[%s6 + $0x8] sm:$0xff]
    %v289 = vld [vmem:[%s6 + $0x10] sm:$0xff]
    %v290 = vld [vmem:[%s6 + $0x18] sm:$0xff]
    %v291 = vld [vmem:[%s6 + $0x20] sm:$0xff]
    %v292 = vld [vmem:[%s6 + $0x28] sm:$0xff]
    %v293 = vld [vmem:[%s6 + $0x30] sm:$0xff]
    %v294 = vld [vmem:[%s6 + $0x38] sm:$0xff]
    %v295 = vld [vmem:[%s6 + $0x40] sm:$0xff]
    %v296 = vld [vmem:[%s6 + $0x48] sm:$0xff]
    %v297 = vld [vmem:[%s6 + $0x50] sm:$0xff]
    %v298 = vld [vmem:[%s6 + $0x58] sm:$0xff]
    %v299 = vld [vmem:[%s6 + $0x60] sm:$0xff]
    %v300 = vld [vmem:[%s6 + $0x68] sm:$0xff]
    %v301 = vld [vmem:[%s6 + $0x70] sm:$0xff]
    %v302 = vld [vmem:[%s6 + $0x78] sm:$0xff]
    %v303 = vld [vmem:[%s6 + $0x80] sm:$0xff]
    %v304 = vld [vmem:[%s6 + $0x88] sm:$0xff]
    %v305 = vld [vmem:[%s6 + $0x90] sm:$0xff]
    %v306 = vld [vmem:[%s6 + $0x98] sm:$0xff]
    %v307 = vld [vmem:[%s6 + $0xa0] sm:$0xff]
    %v308 = vld [vmem:[%s6 + $0xa8] sm:$0xff]
    %v309 = vld [vmem:[%s6 + $0xb0] sm:$0xff]
    %v310 = vld [vmem:[%s6 + $0xb8] sm:$0xff]
    %v311 = vld [vmem:[%s6 + $0xc0] sm:$0xff]
    %v312 = vld [vmem:[%s6 + $0xc8] sm:$0xff]
    %v313 = vld [vmem:[%s6 + $0xd0] sm:$0xff]
    %v314 = vld [vmem:[%s6 + $0xd8] sm:$0xff]
    %v315 = vld [vmem:[%s6 + $0xe0] sm:$0xff]
    %v316 = vld [vmem:[%s6 + $0xe8] sm:$0xff]
    %v317 = vld [vmem:[%s6 + $0xf0] sm:$0xff]
    %v318 = vld [vmem:[%s6 + $0xf8] sm:$0xff]
    %v319 = vld [vmem:[%s6 + $0x100] sm:$0xff]
    %v320 = vld [vmem:[%s6 + $0x108] sm:$0xff]
    %v321 = vld [vmem:[%s6 + $0x110] sm:$0xff]
    %v322 = vld [vmem:[%s6 + $0x118] sm:$0xff]
    %v323 = vld [vmem:[%s6 + $0x120] sm:$0xff]
    %v324 = vld [vmem:[%s6 + $0x128] sm:$0xff]
    %v325 = vld [vmem:[%s6 + $0x130] sm:$0xff]
    %v326 = vld [vmem:[%s6 + $0x138] sm:$0xff]
    %v327 = vld [vmem:[%s6 + $0x140] sm:$0xff]
    %v328 = vld [vmem:[%s6 + $0x148] sm:$0xff]
    %v329 = vld [vmem:[%s6 + $0x150] sm:$0xff]
    %v330 = vld [vmem:[%s6 + $0x158] sm:$0xff]
    %v331 = vld [vmem:[%s6 + $0x160] sm:$0xff]
    %v332 = vld [vmem:[%s6 + $0x168] sm:$0xff]
    %v333 = vld [vmem:[%s6 + $0x170] sm:$0xff]
    %v334 = vld [vmem:[%s6 + $0x178] sm:$0xff]
    %v335 = vperm.slane %v66, 1
    %v336 = vperm.slane %v66, 5
    %v337 = vperm.slane %v67, 1
    %v341 = vperm.slane %v335, 1
    %v342 = vperm.slane %v336, 1
    %v343 = vperm.slane %v337, 1
    %344 = vmatpush.msra.mxu0 %v332
    %345 = vmatpush.msra.mxu0 %v329
    %346 = vmatpush.msra.mxu0 %v326
    %347 = vmatpush.msra.mxu0 %v323
    %348 = vmatpush.msra.mxu0 %v320
    %349 = vmatpush.msra.mxu0 %v317
    %350 = vmatpush.msra.mxu0 %v314
    %351 = vmatpush.msra.mxu0 %v311
    %352 = vmatpush.msra.mxu0 %v308
    %353 = vmatpush.msra.mxu0 %v305
    %354 = vmatpush.msra.mxu0 %v302
    %355 = vmatpush.msra.mxu0 %v299
    %356 = vmatpush.msra.mxu0 %v296
    %357 = vmatpush.msra.mxu0 %v293
    %358 = vmatpush.msra.mxu0 %v290
    %359 = vmatpush.msra.mxu0 %v287
    %360 = vmatmul.f32.gmra.mxu0 %v65
    %v361 = vpop.f32.mrf.mxu0
    %v362 = vadd.f32 %v341, %v361
    %363 = vdwg.mxu0
    %364 = vmatpush.msra.mxu0 %v333
    %365 = vmatpush.msra.mxu0 %v330
    %366 = vmatpush.msra.mxu0 %v327
    %367 = vmatpush.msra.mxu0 %v324
    %368 = vmatpush.msra.mxu0 %v321
    %369 = vmatpush.msra.mxu0 %v318
    %370 = vmatpush.msra.mxu0 %v315
    %371 = vmatpush.msra.mxu0 %v312
    %372 = vmatpush.msra.mxu0 %v309
    %373 = vmatpush.msra.mxu0 %v306
    %374 = vmatpush.msra.mxu0 %v303
    %375 = vmatpush.msra.mxu0 %v300
    %376 = vmatpush.msra.mxu0 %v297
    %377 = vmatpush.msra.mxu0 %v294
    %378 = vmatpush.msra.mxu0 %v291
    %379 = vmatpush.msra.mxu0 %v288
    %380 = vmatmul.f32.gmra.mxu0 %v65
    %v381 = vpop.f32.mrf.mxu0
    %v382 = vadd.f32 %v342, %v381
    %383 = vdwg.mxu0
    %384 = vmatpush.msra.mxu0 %v334
    %385 = vmatpush.msra.mxu0 %v331
    %386 = vmatpush.msra.mxu0 %v328
    %387 = vmatpush.msra.mxu0 %v325
    %388 = vmatpush.msra.mxu0 %v322
    %389 = vmatpush.msra.mxu0 %v319
    %390 = vmatpush.msra.mxu0 %v316
    %391 = vmatpush.msra.mxu0 %v313
    %392 = vmatpush.msra.mxu0 %v310
    %393 = vmatpush.msra.mxu0 %v307
    %394 = vmatpush.msra.mxu0 %v304
    %395 = vmatpush.msra.mxu0 %v301
    %396 = vmatpush.msra.mxu0 %v298
    %397 = vmatpush.msra.mxu0 %v295
    %398 = vmatpush.msra.mxu0 %v292
    %399 = vmatpush.msra.mxu0 %v289
    %400 = vmatmul.f32.gmra.mxu0 %v65
    %v401 = vpop.f32.mrf.mxu0
    %v402 = vadd.f32 %v343, %v401
    %403 = vdwg.mxu0
    %v404 = vadd.f32 %v245, %v362
    %v405 = vsub.f32 0.0, %v404
    %v406 = vmul.f32 %v405, 1.442695
    %v407 = vpow.pop %v406
    %v408 = vadd.f32 %v407, 1.0
    %v409 = vrcp.pop %v408
    %v410 = vmul.f32 %v408, %v409
    %v411 = vsub.f32 1.0, %v410
    %v412 = vmul.f32 %v409, %v411
    %v413 = vadd.f32 %v409, %v412
    %vm414 = vweird.f32 %v408
    %vm415 = vweird.f32 %v409
    %vm416 = vmor %vm414, %vm415
    %v417 = vsel %vm416, %v409, %v413
    %v418 = vand.u32 2147483647, %v408
    %vm419 = vcmp.eq.f32.partialorder %v418, 8.507059e+37
    %v420 = vand.u32 %v408, 2147483648
    %v421 = vor.u32 1.1754944e-38, %v420
    %v422 = vsel %vm419, %v421, %v417
    %v423 = vmul.f32 1.0, %v422
    %v424 = vadd.f32 %v265, %v382
    %v425 = vsub.f32 0.0, %v424
    %v426 = vmul.f32 %v425, 1.442695
    %v427 = vpow.pop %v426
    %v428 = vadd.f32 %v427, 1.0
    %v429 = vrcp.pop %v428
    %v430 = vmul.f32 %v428, %v429
    %v431 = vsub.f32 1.0, %v430
    %v432 = vmul.f32 %v429, %v431
    %v433 = vadd.f32 %v429, %v432
    %vm434 = vweird.f32 %v428
    %vm435 = vweird.f32 %v429
    %vm436 = vmor %vm434, %vm435
    %v437 = vsel %vm436, %v429, %v433
    %v438 = vand.u32 2147483647, %v428
    %vm439 = vcmp.eq.f32.partialorder %v438, 8.507059e+37
    %v440 = vand.u32 %v428, 2147483648
    %v441 = vor.u32 1.1754944e-38, %v440
    %v442 = vsel %vm439, %v441, %v437
    %v443 = vmul.f32 1.0, %v442
    %v444 = vmul.f32 %v423, %v402
    %v445 = vadd.f32 %v285, %v444
    %v446 = vtanh.pop %v445
    %v447 = vsub.f32 1.0, %v443
    %v448 = vmul.f32 %v447, %v446
    %v449 = vmul.f32 %v443, %v65
    %v450 = vadd.f32 %v448, %v449
    %v452 = vrot.slane %v450, 1
    %v453 = vrot.slane %v450, 2
    %v454 = vrot.slane %v450, 3
    %v455 = vrot.slane %v450, 4
    %v456 = vrot.slane %v450, 5
    %v457 = vrot.slane %v450, 6
    %v458 = vrot.slane %v450, 7
    %v466 = vld [vmem:[%s4] sm:$0xff]
    %v467 = vld [vmem:[%s4 + $0x8] sm:$0xff]
    %v468 = vld [vmem:[%s4 + $0x10] sm:$0xff]
    %v469 = vld [vmem:[%s4 + $0x18] sm:$0xff]
    %v470 = vld [vmem:[%s4 + $0x20] sm:$0xff]
    %v471 = vld [vmem:[%s4 + $0x28] sm:$0xff]
    %v472 = vld [vmem:[%s4 + $0x30] sm:$0xff]
    %v473 = vld [vmem:[%s4 + $0x38] sm:$0xff]
    %v474 = vld [vmem:[%s4 + $0x40] sm:$0xff]
    %v475 = vld [vmem:[%s4 + $0x48] sm:$0xff]
    %v476 = vld [vmem:[%s4 + $0x50] sm:$0xff]
    %v477 = vld [vmem:[%s4 + $0x58] sm:$0xff]
    %v478 = vld [vmem:[%s4 + $0x60] sm:$0xff]
    %v479 = vld [vmem:[%s4 + $0x68] sm:$0xff]
    %v480 = vld [vmem:[%s4 + $0x70] sm:$0xff]
    %v481 = vld [vmem:[%s4 + $0x78] sm:$0xff]
    %v482 = vld [vmem:[%s4 + $0x80] sm:$0xff]
    %v483 = vld [vmem:[%s4 + $0x88] sm:$0xff]
    %v484 = vld [vmem:[%s4 + $0x90] sm:$0xff]
    %v485 = vld [vmem:[%s4 + $0x98] sm:$0xff]
    %v486 = vld [vmem:[%s4 + $0xa0] sm:$0xff]
    %v487 = vld [vmem:[%s4 + $0xa8] sm:$0xff]
    %v488 = vld [vmem:[%s4 + $0xb0] sm:$0xff]
    %v489 = vld [vmem:[%s4 + $0xb8] sm:$0xff]
    %v490 = vld [vmem:[%s4 + $0xc0] sm:$0xff]
    %v491 = vld [vmem:[%s4 + $0xc8] sm:$0xff]
    %v492 = vld [vmem:[%s4 + $0xd0] sm:$0xff]
    %v493 = vld [vmem:[%s4 + $0xd8] sm:$0xff]
    %v494 = vld [vmem:[%s4 + $0xe0] sm:$0xff]
    %v495 = vld [vmem:[%s4 + $0xe8] sm:$0xff]
    %v496 = vld [vmem:[%s4 + $0xf0] sm:$0xff]
    %v497 = vld [vmem:[%s4 + $0xf8] sm:$0xff]
    %v498 = vld [vmem:[%s4 + $0x100] sm:$0xff]
    %v499 = vld [vmem:[%s4 + $0x108] sm:$0xff]
    %v500 = vld [vmem:[%s4 + $0x110] sm:$0xff]
    %v501 = vld [vmem:[%s4 + $0x118] sm:$0xff]
    %v502 = vld [vmem:[%s4 + $0x120] sm:$0xff]
    %v503 = vld [vmem:[%s4 + $0x128] sm:$0xff]
    %v504 = vld [vmem:[%s4 + $0x130] sm:$0xff]
    %v505 = vld [vmem:[%s4 + $0x138] sm:$0xff]
    %v506 = vld [vmem:[%s4 + $0x140] sm:$0xff]
    %v507 = vld [vmem:[%s4 + $0x148] sm:$0xff]
    %v508 = vld [vmem:[%s4 + $0x150] sm:$0xff]
    %v509 = vld [vmem:[%s4 + $0x158] sm:$0xff]
    %v510 = vld [vmem:[%s4 + $0x160] sm:$0xff]
    %v511 = vld [vmem:[%s4 + $0x168] sm:$0xff]
    %v512 = vld [vmem:[%s4 + $0x170] sm:$0xff]
    %v513 = vld [vmem:[%s4 + $0x178] sm:$0xff]
    %v514 = vld [vmem:[%s4 + $0x180] sm:$0xff]
    %v515 = vld [vmem:[%s4 + $0x188] sm:$0xff]
    %v516 = vld [vmem:[%s4 + $0x190] sm:$0xff]
    %v517 = vld [vmem:[%s4 + $0x198] sm:$0xff]
    %v518 = vld [vmem:[%s4 + $0x1a0] sm:$0xff]
    %v519 = vld [vmem:[%s4 + $0x1a8] sm:$0xff]
    %v520 = vld [vmem:[%s4 + $0x1b0] sm:$0xff]
    %v521 = vld [vmem:[%s4 + $0x1b8] sm:$0xff]
    %v522 = vld [vmem:[%s4 + $0x1c0] sm:$0xff]
    %v523 = vld [vmem:[%s4 + $0x1c8] sm:$0xff]
    %v524 = vld [vmem:[%s4 + $0x1d0] sm:$0xff]
    %v525 = vld [vmem:[%s4 + $0x1d8] sm:$0xff]
    %v526 = vld [vmem:[%s4 + $0x1e0] sm:$0xff]
    %v527 = vld [vmem:[%s4 + $0x1e8] sm:$0xff]
    %v528 = vld [vmem:[%s4 + $0x1f0] sm:$0xff]
    %v529 = vld [vmem:[%s4 + $0x1f8] sm:$0xff]
    %v530 = vld [vmem:[%s4 + $0x200] sm:$0xff]
    %v531 = vld [vmem:[%s4 + $0x208] sm:$0xff]
    %v532 = vld [vmem:[%s4 + $0x210] sm:$0xff]
    %v533 = vld [vmem:[%s4 + $0x218] sm:$0xff]
    %v534 = vld [vmem:[%s4 + $0x220] sm:$0xff]
    %v535 = vld [vmem:[%s4 + $0x228] sm:$0xff]
    %v536 = vld [vmem:[%s4 + $0x230] sm:$0xff]
    %v537 = vld [vmem:[%s4 + $0x238] sm:$0xff]
    %v538 = vld [vmem:[%s4 + $0x240] sm:$0xff]
    %v539 = vld [vmem:[%s4 + $0x248] sm:$0xff]
    %v540 = vld [vmem:[%s4 + $0x250] sm:$0xff]
    %v541 = vld [vmem:[%s4 + $0x258] sm:$0xff]
    %v542 = vld [vmem:[%s4 + $0x260] sm:$0xff]
    %v543 = vld [vmem:[%s4 + $0x268] sm:$0xff]
    %v544 = vld [vmem:[%s4 + $0x270] sm:$0xff]
    %v545 = vld [vmem:[%s4 + $0x278] sm:$0xff]
    %v546 = vld [vmem:[%s4 + $0x280] sm:$0xff]
    %v547 = vld [vmem:[%s4 + $0x288] sm:$0xff]
    %v548 = vld [vmem:[%s4 + $0x290] sm:$0xff]
    %v549 = vld [vmem:[%s4 + $0x298] sm:$0xff]
    %v550 = vld [vmem:[%s4 + $0x2a0] sm:$0xff]
    %v551 = vld [vmem:[%s4 + $0x2a8] sm:$0xff]
    %v552 = vld [vmem:[%s4 + $0x2b0] sm:$0xff]
    %v553 = vld [vmem:[%s4 + $0x2b8] sm:$0xff]
    %v554 = vld [vmem:[%s4 + $0x2c0] sm:$0xff]
    %v555 = vld [vmem:[%s4 + $0x2c8] sm:$0xff]
    %v556 = vld [vmem:[%s4 + $0x2d0] sm:$0xff]
    %v557 = vld [vmem:[%s4 + $0x2d8] sm:$0xff]
    %v558 = vld [vmem:[%s4 + $0x2e0] sm:$0xff]
    %v559 = vld [vmem:[%s4 + $0x2e8] sm:$0xff]
    %v560 = vld [vmem:[%s4 + $0x2f0] sm:$0xff]
    %v561 = vld [vmem:[%s4 + $0x2f8] sm:$0xff]
    %v562 = vld [vmem:[%s4 + $0x300] sm:$0xff]
    %v563 = vld [vmem:[%s4 + $0x308] sm:$0xff]
    %v564 = vld [vmem:[%s4 + $0x310] sm:$0xff]
    %v565 = vld [vmem:[%s4 + $0x318] sm:$0xff]
    %v566 = vld [vmem:[%s4 + $0x320] sm:$0xff]
    %v567 = vld [vmem:[%s4 + $0x328] sm:$0xff]
    %v568 = vld [vmem:[%s4 + $0x330] sm:$0xff]
    %v569 = vld [vmem:[%s4 + $0x338] sm:$0xff]
    %v570 = vld [vmem:[%s4 + $0x340] sm:$0xff]
    %v571 = vld [vmem:[%s4 + $0x348] sm:$0xff]
    %v572 = vld [vmem:[%s4 + $0x350] sm:$0xff]
    %v573 = vld [vmem:[%s4 + $0x358] sm:$0xff]
    %v574 = vld [vmem:[%s4 + $0x360] sm:$0xff]
    %v575 = vld [vmem:[%s4 + $0x368] sm:$0xff]
    %v576 = vld [vmem:[%s4 + $0x370] sm:$0xff]
    %v577 = vld [vmem:[%s4 + $0x378] sm:$0xff]
    %v578 = vld [vmem:[%s4 + $0x380] sm:$0xff]
    %v579 = vld [vmem:[%s4 + $0x388] sm:$0xff]
    %v580 = vld [vmem:[%s4 + $0x390] sm:$0xff]
    %v581 = vld [vmem:[%s4 + $0x398] sm:$0xff]
    %v582 = vld [vmem:[%s4 + $0x3a0] sm:$0xff]
    %v583 = vld [vmem:[%s4 + $0x3a8] sm:$0xff]
    %v584 = vld [vmem:[%s4 + $0x3b0] sm:$0xff]
    %v585 = vld [vmem:[%s4 + $0x3b8] sm:$0xff]
    %v586 = vld [vmem:[%s4 + $0x3c0] sm:$0xff]
    %v587 = vld [vmem:[%s4 + $0x3c8] sm:$0xff]
    %v588 = vld [vmem:[%s4 + $0x3d0] sm:$0xff]
    %v589 = vld [vmem:[%s4 + $0x3d8] sm:$0xff]
    %v590 = vld [vmem:[%s4 + $0x3e0] sm:$0xff]
    %v591 = vld [vmem:[%s4 + $0x3e8] sm:$0xff]
    %v592 = vld [vmem:[%s4 + $0x3f0] sm:$0xff]
    %v593 = vld [vmem:[%s4 + $0x3f8] sm:$0xff]
    %594 = vmatpush.msra.mxu0 %v481
    %595 = vmatpush.msra.mxu0 %v480
    %596 = vmatpush.msra.mxu0 %v479
    %597 = vmatpush.msra.mxu0 %v478
    %598 = vmatpush.msra.mxu0 %v477
    %599 = vmatpush.msra.mxu0 %v476
    %600 = vmatpush.msra.mxu0 %v475
    %601 = vmatpush.msra.mxu0 %v474
    %602 = vmatpush.msra.mxu0 %v473
    %603 = vmatpush.msra.mxu0 %v472
    %604 = vmatpush.msra.mxu0 %v471
    %605 = vmatpush.msra.mxu0 %v470
    %606 = vmatpush.msra.mxu0 %v469
    %607 = vmatpush.msra.mxu0 %v468
    %608 = vmatpush.msra.mxu0 %v467
    %609 = vmatpush.msra.mxu0 %v466
    %610 = vmatmul.f32.gmra.mxu0 %v450
    %v611 = vpop.f32.mrf.mxu0
    %v612 = vadd.f32 0.0, %v611
    %613 = vdwg.mxu0
    %614 = vmatpush.msra.mxu0 %v497
    %615 = vmatpush.msra.mxu0 %v496
    %616 = vmatpush.msra.mxu0 %v495
    %617 = vmatpush.msra.mxu0 %v494
    %618 = vmatpush.msra.mxu0 %v493
    %619 = vmatpush.msra.mxu0 %v492
    %620 = vmatpush.msra.mxu0 %v491
    %621 = vmatpush.msra.mxu0 %v490
    %622 = vmatpush.msra.mxu0 %v489
    %623 = vmatpush.msra.mxu0 %v488
    %624 = vmatpush.msra.mxu0 %v487
    %625 = vmatpush.msra.mxu0 %v486
    %626 = vmatpush.msra.mxu0 %v485
    %627 = vmatpush.msra.mxu0 %v484
    %628 = vmatpush.msra.mxu0 %v483
    %629 = vmatpush.msra.mxu0 %v482
    %630 = vmatmul.f32.gmra.mxu0 %v452
    %v631 = vpop.f32.mrf.mxu0
    %v632 = vadd.f32 0.0, %v631
    %633 = vdwg.mxu0
    %634 = vmatpush.msra.mxu0 %v513
    %635 = vmatpush.msra.mxu0 %v512
    %636 = vmatpush.msra.mxu0 %v511
    %637 = vmatpush.msra.mxu0 %v510
    %638 = vmatpush.msra.mxu0 %v509
    %639 = vmatpush.msra.mxu0 %v508
    %640 = vmatpush.msra.mxu0 %v507
    %641 = vmatpush.msra.mxu0 %v506
    %642 = vmatpush.msra.mxu0 %v505
    %643 = vmatpush.msra.mxu0 %v504
    %644 = vmatpush.msra.mxu0 %v503
    %645 = vmatpush.msra.mxu0 %v502
    %646 = vmatpush.msra.mxu0 %v501
    %647 = vmatpush.msra.mxu0 %v500
    %648 = vmatpush.msra.mxu0 %v499
    %649 = vmatpush.msra.mxu0 %v498
    %650 = vmatmul.f32.gmra.mxu0 %v453
    %v651 = vpop.f32.mrf.mxu0
    %v652 = vadd.f32 0.0, %v651
    %653 = vdwg.mxu0
    %654 = vmatpush.msra.mxu0 %v529
    %655 = vmatpush.msra.mxu0 %v528
    %656 = vmatpush.msra.mxu0 %v527
    %657 = vmatpush.msra.mxu0 %v526
    %658 = vmatpush.msra.mxu0 %v525
    %659 = vmatpush.msra.mxu0 %v524
    %660 = vmatpush.msra.mxu0 %v523
    %661 = vmatpush.msra.mxu0 %v522
    %662 = vmatpush.msra.mxu0 %v521
    %663 = vmatpush.msra.mxu0 %v520
    %664 = vmatpush.msra.mxu0 %v519
    %665 = vmatpush.msra.mxu0 %v518
    %666 = vmatpush.msra.mxu0 %v517
    %667 = vmatpush.msra.mxu0 %v516
    %668 = vmatpush.msra.mxu0 %v515
    %669 = vmatpush.msra.mxu0 %v514
    %670 = vmatmul.f32.gmra.mxu0 %v454
    %v671 = vpop.f32.mrf.mxu0
    %v672 = vadd.f32 0.0, %v671
    %673 = vdwg.mxu0
    %674 = vmatpush.msra.mxu0 %v545
    %675 = vmatpush.msra.mxu0 %v544
    %676 = vmatpush.msra.mxu0 %v543
    %677 = vmatpush.msra.mxu0 %v542
    %678 = vmatpush.msra.mxu0 %v541
    %679 = vmatpush.msra.mxu0 %v540
    %680 = vmatpush.msra.mxu0 %v539
    %681 = vmatpush.msra.mxu0 %v538
    %682 = vmatpush.msra.mxu0 %v537
    %683 = vmatpush.msra.mxu0 %v536
    %684 = vmatpush.msra.mxu0 %v535
    %685 = vmatpush.msra.mxu0 %v534
    %686 = vmatpush.msra.mxu0 %v533
    %687 = vmatpush.msra.mxu0 %v532
    %688 = vmatpush.msra.mxu0 %v531
    %689 = vmatpush.msra.mxu0 %v530
    %690 = vmatmul.f32.gmra.mxu0 %v455
    %v691 = vpop.f32.mrf.mxu0
    %v692 = vadd.f32 0.0, %v691
    %693 = vdwg.mxu0
    %694 = vmatpush.msra.mxu0 %v561
    %695 = vmatpush.msra.mxu0 %v560
    %696 = vmatpush.msra.mxu0 %v559
    %697 = vmatpush.msra.mxu0 %v558
    %698 = vmatpush.msra.mxu0 %v557
    %699 = vmatpush.msra.mxu0 %v556
    %700 = vmatpush.msra.mxu0 %v555
    %701 = vmatpush.msra.mxu0 %v554
    %702 = vmatpush.msra.mxu0 %v553
    %703 = vmatpush.msra.mxu0 %v552
    %704 = vmatpush.msra.mxu0 %v551
    %705 = vmatpush.msra.mxu0 %v550
    %706 = vmatpush.msra.mxu0 %v549
    %707 = vmatpush.msra.mxu0 %v548
    %708 = vmatpush.msra.mxu0 %v547
    %709 = vmatpush.msra.mxu0 %v546
    %710 = vmatmul.f32.gmra.mxu0 %v456
    %v711 = vpop.f32.mrf.mxu0
    %v712 = vadd.f32 0.0, %v711
    %713 = vdwg.mxu0
    %714 = vmatpush.msra.mxu0 %v577
    %715 = vmatpush.msra.mxu0 %v576
    %716 = vmatpush.msra.mxu0 %v575
    %717 = vmatpush.msra.mxu0 %v574
    %718 = vmatpush.msra.mxu0 %v573
    %719 = vmatpush.msra.mxu0 %v572
    %720 = vmatpush.msra.mxu0 %v571
    %721 = vmatpush.msra.mxu0 %v570
    %722 = vmatpush.msra.mxu0 %v569
    %723 = vmatpush.msra.mxu0 %v568
    %724 = vmatpush.msra.mxu0 %v567
    %725 = vmatpush.msra.mxu0 %v566
    %726 = vmatpush.msra.mxu0 %v565
    %727 = vmatpush.msra.mxu0 %v564
    %728 = vmatpush.msra.mxu0 %v563
    %729 = vmatpush.msra.mxu0 %v562
    %730 = vmatmul.f32.gmra.mxu0 %v457
    %v731 = vpop.f32.mrf.mxu0
    %v732 = vadd.f32 0.0, %v731
    %733 = vdwg.mxu0
    %734 = vmatpush.msra.mxu0 %v593
    %735 = vmatpush.msra.mxu0 %v592
    %736 = vmatpush.msra.mxu0 %v591
    %737 = vmatpush.msra.mxu0 %v590
    %738 = vmatpush.msra.mxu0 %v589
    %739 = vmatpush.msra.mxu0 %v588
    %740 = vmatpush.msra.mxu0 %v587
    %741 = vmatpush.msra.mxu0 %v586
    %742 = vmatpush.msra.mxu0 %v585
    %743 = vmatpush.msra.mxu0 %v584
    %744 = vmatpush.msra.mxu0 %v583
    %745 = vmatpush.msra.mxu0 %v582
    %746 = vmatpush.msra.mxu0 %v581
    %747 = vmatpush.msra.mxu0 %v580
    %748 = vmatpush.msra.mxu0 %v579
    %749 = vmatpush.msra.mxu0 %v578
    %750 = vmatmul.f32.gmra.mxu0 %v458
    %v751 = vpop.f32.mrf.mxu0
    %v752 = vadd.f32 0.0, %v751
    %753 = vdwg.mxu0
    %vm754 = vcmask 57344
    %v755 = vsel %vm754, %v612, -inf
    %756 = vmax.xlane.f32.xlu0 %v755
    %v757 = vpop.xlane.xlu0 %756
    %v758 = vsel %vm754, %v632, -inf
    %759 = vmax.xlane.f32.xlu0 %v758
    %v760 = vpop.xlane.xlu0 %759
    %v761 = vsel %vm754, %v652, -inf
    %762 = vmax.xlane.f32.xlu0 %v761
    %v763 = vpop.xlane.xlu0 %762
    %v764 = vsel %vm754, %v672, -inf
    %765 = vmax.xlane.f32.xlu0 %v764
    %v766 = vpop.xlane.xlu0 %765
    %v767 = vsel %vm754, %v692, -inf
    %768 = vmax.xlane.f32.xlu0 %v767
    %v769 = vpop.xlane.xlu0 %768
    %v770 = vsel %vm754, %v712, -inf
    %771 = vmax.xlane.f32.xlu0 %v770
    %v772 = vpop.xlane.xlu0 %771
    %v773 = vsel %vm754, %v732, -inf
    %774 = vmax.xlane.f32.xlu0 %v773
    %v775 = vpop.xlane.xlu0 %774
    %v776 = vsel %vm754, %v752, -inf
    %777 = vmax.xlane.f32.xlu0 %v776
    %v778 = vpop.xlane.xlu0 %777
    %v779 = vsub.f32 %v612, %v757
    %v780 = vsub.f32 %v632, %v760
    %v781 = vsub.f32 %v652, %v763
    %v782 = vsub.f32 %v672, %v766
    %v783 = vsub.f32 %v692, %v769
    %v784 = vsub.f32 %v712, %v772
    %v785 = vsub.f32 %v732, %v775
    %v786 = vsub.f32 %v752, %v778
    %v787 = vmul.f32 %v779, 1.442695
    %v788 = vpow.pop %v787
    %v789 = vmul.f32 %v780, 1.442695
    %v790 = vpow.pop %v789
    %v791 = vmul.f32 %v781, 1.442695
    %v792 = vpow.pop %v791
    %v793 = vmul.f32 %v782, 1.442695
    %v794 = vpow.pop %v793
    %v795 = vmul.f32 %v783, 1.442695
    %v796 = vpow.pop %v795
    %v797 = vmul.f32 %v784, 1.442695
    %v798 = vpow.pop %v797
    %v799 = vmul.f32 %v785, 1.442695
    %v800 = vpow.pop %v799
    %v801 = vmul.f32 %v786, 1.442695
    %v802 = vpow.pop %v801
    %v803 = vsel %vm754, %v788, 0.0
    %804 = vadd.xlane.f32.xlu0 %v803
    %v805 = vpop.xlane.xlu0 %804
    %v806 = vsel %vm754, %v790, 0.0
    %807 = vadd.xlane.f32.xlu0 %v806
    %v808 = vpop.xlane.xlu0 %807
    %v809 = vsel %vm754, %v792, 0.0
    %810 = vadd.xlane.f32.xlu0 %v809
    %v811 = vpop.xlane.xlu0 %810
    %v812 = vsel %vm754, %v794, 0.0
    %813 = vadd.xlane.f32.xlu0 %v812
    %v814 = vpop.xlane.xlu0 %813
    %v815 = vsel %vm754, %v796, 0.0
    %816 = vadd.xlane.f32.xlu0 %v815
    %v817 = vpop.xlane.xlu0 %816
    %v818 = vsel %vm754, %v798, 0.0
    %819 = vadd.xlane.f32.xlu0 %v818
    %v820 = vpop.xlane.xlu0 %819
    %v821 = vsel %vm754, %v800, 0.0
    %822 = vadd.xlane.f32.xlu0 %v821
    %v823 = vpop.xlane.xlu0 %822
    %v824 = vsel %vm754, %v802, 0.0
    %825 = vadd.xlane.f32.xlu0 %v824
    %v826 = vpop.xlane.xlu0 %825
    %v827 = vrcp.pop %v805
    %v828 = vrcp.pop %v808
    %v829 = vrcp.pop %v811
    %v830 = vrcp.pop %v814
    %v831 = vrcp.pop %v817
    %v832 = vrcp.pop %v820
    %v833 = vrcp.pop %v823
    %v834 = vrcp.pop %v826
    %v835 = vmul.f32 %v788, %v827
    %v836 = vmul.f32 %v790, %v828
    %v837 = vmul.f32 %v792, %v829
    %v838 = vmul.f32 %v794, %v830
    %v839 = vmul.f32 %v796, %v831
    %v840 = vmul.f32 %v798, %v832
    %v841 = vmul.f32 %v800, %v833
    %v842 = vmul.f32 %v802, %v834
    %v843 = vld [vmem:[%s3] sm:$0xff]
    %v844 = vld [vmem:[%s3 + $0x8] sm:$0xff]
    %v845 = vld [vmem:[%s3 + $0x10] sm:$0xff]
    %v846 = vld [vmem:[%s3 + $0x18] sm:$0xff]
    %v847 = vld [vmem:[%s3 + $0x20] sm:$0xff]
    %v848 = vld [vmem:[%s3 + $0x28] sm:$0xff]
    %v849 = vld [vmem:[%s3 + $0x30] sm:$0xff]
    %v850 = vld [vmem:[%s3 + $0x38] sm:$0xff]
    %vm851 = vcmask 64512
    %v853 = vsel %vm851, %v835, 0
    %855 = vmatpush.msra.mxu0 0.0
    %856 = vmatpush.msra.mxu0 0.0
    %857 = vmatpush.msra.mxu0 0.0
    %858 = vmatpush.msra.mxu0 0.0
    %859 = vmatpush.msra.mxu0 0.0
    %860 = vmatpush.msra.mxu0 0.0
    %861 = vmatpush.msra.mxu0 0.0
    %862 = vmatpush.msra.mxu0 0.0
    %863 = vmatpush.msra.mxu0 0.0
    %864 = vmatpush.msra.mxu0 0.0
    %865 = vmatpush.msra.mxu0 0.0
    %866 = vmatpush.msra.mxu0 0.0
    %867 = vmatpush.msra.mxu0 0.0
    %868 = vmatpush.msra.mxu0 0.0
    %869 = vmatpush.msra.mxu0 0.0
    %870 = vmatpush.msra.mxu0 %v843
    %871 = vmatmul.f32.gmra.mxu0 %v853
    %v872 = vpop.f32.mrf.mxu0
    %v873 = vadd.f32 0.0, %v872
    %874 = vdwg.mxu0
    %v876 = vsel %vm851, %v836, 0
    %878 = vmatpush.msra.mxu0 0.0
    %879 = vmatpush.msra.mxu0 0.0
    %880 = vmatpush.msra.mxu0 0.0
    %881 = vmatpush.msra.mxu0 0.0
    %882 = vmatpush.msra.mxu0 0.0
    %883 = vmatpush.msra.mxu0 0.0
    %884 = vmatpush.msra.mxu0 0.0
    %885 = vmatpush.msra.mxu0 0.0
    %886 = vmatpush.msra.mxu0 0.0
    %887 = vmatpush.msra.mxu0 0.0
    %888 = vmatpush.msra.mxu0 0.0
    %889 = vmatpush.msra.mxu0 0.0
    %890 = vmatpush.msra.mxu0 0.0
    %891 = vmatpush.msra.mxu0 0.0
    %892 = vmatpush.msra.mxu0 0.0
    %893 = vmatpush.msra.mxu0 %v844
    %894 = vmatmul.f32.gmra.mxu0 %v876
    %v895 = vpop.f32.mrf.mxu0
    %v896 = vadd.f32 0.0, %v895
    %897 = vdwg.mxu0
    %v899 = vsel %vm851, %v837, 0
    %901 = vmatpush.msra.mxu0 0.0
    %902 = vmatpush.msra.mxu0 0.0
    %903 = vmatpush.msra.mxu0 0.0
    %904 = vmatpush.msra.mxu0 0.0
    %905 = vmatpush.msra.mxu0 0.0
    %906 = vmatpush.msra.mxu0 0.0
    %907 = vmatpush.msra.mxu0 0.0
    %908 = vmatpush.msra.mxu0 0.0
    %909 = vmatpush.msra.mxu0 0.0
    %910 = vmatpush.msra.mxu0 0.0
    %911 = vmatpush.msra.mxu0 0.0
    %912 = vmatpush.msra.mxu0 0.0
    %913 = vmatpush.msra.mxu0 0.0
    %914 = vmatpush.msra.mxu0 0.0
    %915 = vmatpush.msra.mxu0 0.0
    %916 = vmatpush.msra.mxu0 %v845
    %917 = vmatmul.f32.gmra.mxu0 %v899
    %v918 = vpop.f32.mrf.mxu0
    %v919 = vadd.f32 0.0, %v918
    %920 = vdwg.mxu0
    %v922 = vsel %vm851, %v838, 0
    %924 = vmatpush.msra.mxu0 0.0
    %925 = vmatpush.msra.mxu0 0.0
    %926 = vmatpush.msra.mxu0 0.0
    %927 = vmatpush.msra.mxu0 0.0
    %928 = vmatpush.msra.mxu0 0.0
    %929 = vmatpush.msra.mxu0 0.0
    %930 = vmatpush.msra.mxu0 0.0
    %931 = vmatpush.msra.mxu0 0.0
    %932 = vmatpush.msra.mxu0 0.0
    %933 = vmatpush.msra.mxu0 0.0
    %934 = vmatpush.msra.mxu0 0.0
    %935 = vmatpush.msra.mxu0 0.0
    %936 = vmatpush.msra.mxu0 0.0
    %937 = vmatpush.msra.mxu0 0.0
    %938 = vmatpush.msra.mxu0 0.0
    %939 = vmatpush.msra.mxu0 %v846
    %940 = vmatmul.f32.gmra.mxu0 %v922
    %v941 = vpop.f32.mrf.mxu0
    %v942 = vadd.f32 0.0, %v941
    %943 = vdwg.mxu0
    %v945 = vsel %vm851, %v839, 0
    %947 = vmatpush.msra.mxu0 0.0
    %948 = vmatpush.msra.mxu0 0.0
    %949 = vmatpush.msra.mxu0 0.0
    %950 = vmatpush.msra.mxu0 0.0
    %951 = vmatpush.msra.mxu0 0.0
    %952 = vmatpush.msra.mxu0 0.0
    %953 = vmatpush.msra.mxu0 0.0
    %954 = vmatpush.msra.mxu0 0.0
    %955 = vmatpush.msra.mxu0 0.0
    %956 = vmatpush.msra.mxu0 0.0
    %957 = vmatpush.msra.mxu0 0.0
    %958 = vmatpush.msra.mxu0 0.0
    %959 = vmatpush.msra.mxu0 0.0
    %960 = vmatpush.msra.mxu0 0.0
    %961 = vmatpush.msra.mxu0 0.0
    %962 = vmatpush.msra.mxu0 %v847
    %963 = vmatmul.f32.gmra.mxu0 %v945
    %v964 = vpop.f32.mrf.mxu0
    %v965 = vadd.f32 0.0, %v964
    %966 = vdwg.mxu0
    %v968 = vsel %vm851, %v840, 0
    %970 = vmatpush.msra.mxu0 0.0
    %971 = vmatpush.msra.mxu0 0.0
    %972 = vmatpush.msra.mxu0 0.0
    %973 = vmatpush.msra.mxu0 0.0
    %974 = vmatpush.msra.mxu0 0.0
    %975 = vmatpush.msra.mxu0 0.0
    %976 = vmatpush.msra.mxu0 0.0
    %977 = vmatpush.msra.mxu0 0.0
    %978 = vmatpush.msra.mxu0 0.0
    %979 = vmatpush.msra.mxu0 0.0
    %980 = vmatpush.msra.mxu0 0.0
    %981 = vmatpush.msra.mxu0 0.0
    %982 = vmatpush.msra.mxu0 0.0
    %983 = vmatpush.msra.mxu0 0.0
    %984 = vmatpush.msra.mxu0 0.0
    %985 = vmatpush.msra.mxu0 %v848
    %986 = vmatmul.f32.gmra.mxu0 %v968
    %v987 = vpop.f32.mrf.mxu0
    %v988 = vadd.f32 0.0, %v987
    %989 = vdwg.mxu0
    %v991 = vsel %vm851, %v841, 0
    %993 = vmatpush.msra.mxu0 0.0
    %994 = vmatpush.msra.mxu0 0.0
    %995 = vmatpush.msra.mxu0 0.0
    %996 = vmatpush.msra.mxu0 0.0
    %997 = vmatpush.msra.mxu0 0.0
    %998 = vmatpush.msra.mxu0 0.0
    %999 = vmatpush.msra.mxu0 0.0
    %1000 = vmatpush.msra.mxu0 0.0
    %1001 = vmatpush.msra.mxu0 0.0
    %1002 = vmatpush.msra.mxu0 0.0
    %1003 = vmatpush.msra.mxu0 0.0
    %1004 = vmatpush.msra.mxu0 0.0
    %1005 = vmatpush.msra.mxu0 0.0
    %1006 = vmatpush.msra.mxu0 0.0
    %1007 = vmatpush.msra.mxu0 0.0
    %1008 = vmatpush.msra.mxu0 %v849
    %1009 = vmatmul.f32.gmra.mxu0 %v991
    %v1010 = vpop.f32.mrf.mxu0
    %v1011 = vadd.f32 0.0, %v1010
    %1012 = vdwg.mxu0
    %v1014 = vsel %vm851, %v842, 0
    %1016 = vmatpush.msra.mxu0 0.0
    %1017 = vmatpush.msra.mxu0 0.0
    %1018 = vmatpush.msra.mxu0 0.0
    %1019 = vmatpush.msra.mxu0 0.0
    %1020 = vmatpush.msra.mxu0 0.0
    %1021 = vmatpush.msra.mxu0 0.0
    %1022 = vmatpush.msra.mxu0 0.0
    %1023 = vmatpush.msra.mxu0 0.0
    %1024 = vmatpush.msra.mxu0 0.0
    %1025 = vmatpush.msra.mxu0 0.0
    %1026 = vmatpush.msra.mxu0 0.0
    %1027 = vmatpush.msra.mxu0 0.0
    %1028 = vmatpush.msra.mxu0 0.0
    %1029 = vmatpush.msra.mxu0 0.0
    %1030 = vmatpush.msra.mxu0 0.0
    %1031 = vmatpush.msra.mxu0 %v850
    %1032 = vmatmul.f32.gmra.mxu0 %v1014
    %v1033 = vpop.f32.mrf.mxu0
    %v1034 = vadd.f32 0.0, %v1033
    %1035 = vdwg.mxu0
    %v1036 = vld [vmem:[%s7] sm:$0xff]
    %v1037 = vld [vmem:[%s7 + $0x8] sm:$0xff]
    %v1038 = vld [vmem:[%s7 + $0x10] sm:$0xff]
    %v1039 = vld [vmem:[%s7 + $0x18] sm:$0xff]
    %v1040 = vld [vmem:[%s7 + $0x20] sm:$0xff]
    %v1041 = vld [vmem:[%s7 + $0x28] sm:$0xff]
    %v1042 = vld [vmem:[%s7 + $0x30] sm:$0xff]
    %v1043 = vld [vmem:[%s7 + $0x38] sm:$0xff]
    %v1044 = vld [vmem:[%s7 + $0x40] sm:$0xff]
    %v1045 = vld [vmem:[%s7 + $0x48] sm:$0xff]
    %v1046 = vld [vmem:[%s7 + $0x50] sm:$0xff]
    %v1047 = vld [vmem:[%s7 + $0x58] sm:$0xff]
    %v1048 = vld [vmem:[%s7 + $0x60] sm:$0xff]
    %v1049 = vld [vmem:[%s7 + $0x68] sm:$0xff]
    %v1050 = vld [vmem:[%s7 + $0x70] sm:$0xff]
    %v1051 = vld [vmem:[%s7 + $0x78] sm:$0xff]
    %v1052 = vld [vmem:[%s7 + $0x80] sm:$0xff]
    %v1053 = vld [vmem:[%s7 + $0x88] sm:$0xff]
    %v1054 = vld [vmem:[%s7 + $0x90] sm:$0xff]
    %v1055 = vld [vmem:[%s7 + $0x98] sm:$0xff]
    %v1056 = vld [vmem:[%s7 + $0xa0] sm:$0xff]
    %v1057 = vld [vmem:[%s7 + $0xa8] sm:$0xff]
    %v1058 = vld [vmem:[%s7 + $0xb0] sm:$0xff]
    %v1059 = vld [vmem:[%s7 + $0xb8] sm:$0xff]
    %v1060 = vld [vmem:[%s7 + $0xc0] sm:$0xff]
    %v1061 = vld [vmem:[%s7 + $0xc8] sm:$0xff]
    %v1062 = vld [vmem:[%s7 + $0xd0] sm:$0xff]
    %v1063 = vld [vmem:[%s7 + $0xd8] sm:$0xff]
    %v1064 = vld [vmem:[%s7 + $0xe0] sm:$0xff]
    %v1065 = vld [vmem:[%s7 + $0xe8] sm:$0xff]
    %v1066 = vld [vmem:[%s7 + $0xf0] sm:$0xff]
    %v1067 = vld [vmem:[%s7 + $0xf8] sm:$0xff]
    %v1076 = vrot.slane %v896, 7
    %vm1077 = vcmask 1041409
    %v1078 = vsel %vm1077, %v1076, %v873
    %v1079 = vrot.slane %v919, 6
    %vm1080 = vcmask 1042434
    %v1081 = vsel %vm1080, %v1079, %v1078
    %v1082 = vrot.slane %v942, 5
    %vm1083 = vcmask 1043459
    %v1084 = vsel %vm1083, %v1082, %v1081
    %v1085 = vrot.slane %v965, 4
    %vm1086 = vcmask 1044484
    %v1087 = vsel %vm1086, %v1085, %v1084
    %v1088 = vrot.slane %v988, 3
    %vm1089 = vcmask 1045509
    %v1090 = vsel %vm1089, %v1088, %v1087
    %v1091 = vrot.slane %v1011, 2
    %vm1092 = vcmask 1046534
    %v1093 = vsel %vm1092, %v1091, %v1090
    %v1094 = vrot.slane %v1034, 1
    %vm1095 = vcmask 1047559
    %v1096 = vsel %vm1095, %v1094, %v1093
    %1098 = vmatpush.msra.mxu0 %v1067
    %1099 = vmatpush.msra.mxu0 %v1066
    %1100 = vmatpush.msra.mxu0 %v1065
    %1101 = vmatpush.msra.mxu0 %v1064
    %1102 = vmatpush.msra.mxu0 %v1063
    %1103 = vmatpush.msra.mxu0 %v1062
    %1104 = vmatpush.msra.mxu0 %v1061
    %1105 = vmatpush.msra.mxu0 %v1060
    %1106 = vmatpush.msra.mxu0 %v1059
    %1107 = vmatpush.msra.mxu0 %v1058
    %1108 = vmatpush.msra.mxu0 %v1057
    %1109 = vmatpush.msra.mxu0 %v1056
    %1110 = vmatpush.msra.mxu0 %v1055
    %1111 = vmatpush.msra.mxu0 %v1054
    %1112 = vmatpush.msra.mxu0 %v1053
    %1113 = vmatpush.msra.mxu0 %v1052
    %1114 = vmatmul.f32.gmra.mxu0 %v1096
    %v1115 = vpop.f32.mrf.mxu0
    %v1116 = vadd.f32 0.0, %v1115
    %1117 = vdwg.mxu0
    %1118 = vmatpush.msra.mxu0 %v1051
    %1119 = vmatpush.msra.mxu0 %v1050
    %1120 = vmatpush.msra.mxu0 %v1049
    %1121 = vmatpush.msra.mxu0 %v1048
    %1122 = vmatpush.msra.mxu0 %v1047
    %1123 = vmatpush.msra.mxu0 %v1046
    %1124 = vmatpush.msra.mxu0 %v1045
    %1125 = vmatpush.msra.mxu0 %v1044
    %1126 = vmatpush.msra.mxu0 %v1043
    %1127 = vmatpush.msra.mxu0 %v1042
    %1128 = vmatpush.msra.mxu0 %v1041
    %1129 = vmatpush.msra.mxu0 %v1040
    %1130 = vmatpush.msra.mxu0 %v1039
    %1131 = vmatpush.msra.mxu0 %v1038
    %1132 = vmatpush.msra.mxu0 %v1037
    %1133 = vmatpush.msra.mxu0 %v1036
    %1134 = vmatmul.f32.gmra.mxu0 %v450
    %v1135 = vpop.f32.mrf.mxu0
    %v1136 = vadd.f32 %v1116, %v1135
    %1137 = vdwg.mxu0
    %v1138 = vperm.slane %v66, 2
    %v1139 = vadd.f32 %v1136, %v1138
    %v1140 = vtanh.pop %v1139
    %v1141 = vld [vmem:[#allocation4] sm:$0xff]
    %v1142 = vld [vmem:[#allocation4 + $0x8] sm:$0xff]
    %v1143 = vld [vmem:[#allocation4 + $0x10] sm:$0xff]
    %v1144 = vld [vmem:[#allocation4 + $0x18] sm:$0xff]
    %v1145 = vld [vmem:[#allocation4 + $0x20] sm:$0xff]
    %v1146 = vld [vmem:[#allocation4 + $0x28] sm:$0xff]
    %v1147 = vld [vmem:[#allocation4 + $0x30] sm:$0xff]
    %v1148 = vld [vmem:[#allocation4 + $0x38] sm:$0xff]
    %v1149 = vld [vmem:[#allocation4 + $0x40] sm:$0xff]
    %v1150 = vld [vmem:[#allocation4 + $0x48] sm:$0xff]
    %v1151 = vld [vmem:[#allocation4 + $0x50] sm:$0xff]
    %v1152 = vld [vmem:[#allocation4 + $0x58] sm:$0xff]
    %v1153 = vld [vmem:[#allocation4 + $0x60] sm:$0xff]
    %v1154 = vld [vmem:[#allocation4 + $0x68] sm:$0xff]
    %v1155 = vld [vmem:[#allocation4 + $0x70] sm:$0xff]
    %v1156 = vld [vmem:[#allocation4 + $0x78] sm:$0xff]
    %v1157 = vperm.slane %v66, 3
    %1158 = vmatpush.msra.mxu0 %v1156
    %1159 = vmatpush.msra.mxu0 %v1155
    %1160 = vmatpush.msra.mxu0 %v1154
    %1161 = vmatpush.msra.mxu0 %v1153
    %1162 = vmatpush.msra.mxu0 %v1152
    %1163 = vmatpush.msra.mxu0 %v1151
    %1164 = vmatpush.msra.mxu0 %v1150
    %1165 = vmatpush.msra.mxu0 %v1149
    %1166 = vmatpush.msra.mxu0 %v1148
    %1167 = vmatpush.msra.mxu0 %v1147
    %1168 = vmatpush.msra.mxu0 %v1146
    %1169 = vmatpush.msra.mxu0 %v1145
    %1170 = vmatpush.msra.mxu0 %v1144
    %1171 = vmatpush.msra.mxu0 %v1143
    %1172 = vmatpush.msra.mxu0 %v1142
    %1173 = vmatpush.msra.mxu0 %v1141
    %1174 = vmatmul.f32.gmra.mxu0 %v1140
    %v1175 = vpop.f32.mrf.mxu0
    %v1176 = vadd.f32 %v1157, %v1175
    %1177 = vdwg.mxu0
    %1178 = vmax.xlane.f32.xlu0 %v1176
    %v1179 = vpop.xlane.xlu0 %1178
    %v1180 = vsub.f32 %v1176, %v1179
    %v1181 = vmul.f32 %v1180, 1.442695
    %v1182 = vpow.pop %v1181
    %1183 = vadd.xlane.f32.xlu0 %v1182
    %v1184 = vpop.xlane.xlu0 %1183
    %v1185 = vrcp.pop %v1184
    %v1186 = vmul.f32 %v1182, %v1185
    %1187 = vst [vmem:[%s10] sm:$0xff] %v1186
    %1188 = vst [vmem:[%s11] sm:$0xff] %v450
    // Predicated region
    $region46: #{luong_attn_decoder_step.1} parent=1 // pred_check
      _
    $region47: #{luong_attn_decoder_step.1} parent=1 // pred_check_branch
      %1190 = sbr.rel (0) target = $region49
    $region48: #{luong_attn_decoder_step.1} parent=1 // pred_region
      _
    $region49: #{luong_attn_decoder_step.1} parent=1 // pred_fallthru
      _
    // Predicated region
    $region50: #{luong_attn_decoder_step.1} parent=1 // pred_check
      _
    $region51: #{luong_attn_decoder_step.1} parent=1 // pred_check_branch
      %1192 = sbr.rel (0) target = $region53
    $region52: #{luong_attn_decoder_step.1} parent=1 // pred_region
      _
    $region53: #{luong_attn_decoder_step.1} parent=1 // pred_fallthru
      _
    // Predicated region
    $region54: #{luong_attn_decoder_step.1} parent=1 // pred_check
      _
    $region55: #{luong_attn_decoder_step.1} parent=1 // pred_check_branch
      %1194 = sbr.rel (0) target = $region57
    $region56: #{luong_attn_decoder_step.1} parent=1 // pred_region
      _
    $region57: #{luong_attn_decoder_step.1} parent=1 // pred_fallthru
      _
    // Predicated region
    $region58: #{luong_attn_decoder_step.1} parent=1 // pred_check
      _
    $region59: #{luong_attn_decoder_step.1} parent=1 // pred_check_branch
      %1196 = sbr.rel (0) target = $region61
    $region60: #{luong_attn_decoder_step.1} parent=1 // pred_region
      _
    $region61: #{luong_attn_decoder_step.1} parent=1 // pred_fallthru
      _
    %1197 = vsyncpa [#allocation5], 1

</llo_original>
